<compile_context>
chip_gen: v5e
topology: v5e:2x2
jax: 0.10.0
libtpu: 0.0.40
codegen_flags: <defaults>
</compile_context>

<pallas_src>
import functools

import jax
import jax.numpy as jnp
from jax.experimental import pallas as pl
from jax.experimental.pallas import tpu as pltpu


TILE_M = 512          # rows of the im2col matrix per grid step
C_PAD = 128           # lane-dense output-channel padding
_VMEM_LIMIT = 32 * 1024 * 1024  # safe on v5e/v6e (128 MiB) and v7x (64 MiB)


def _matmul_stats_kernel(p_ref, w_ref, y_ref, sum_ref, sq_ref):
    """Pass 1: y = p @ w (bf16 operands, f32 acc) + global per-channel stats.

    p: (TILE_M, K) bf16, w: (K, C_PAD) bf16
    y: (TILE_M, C_PAD) f32 tile output
    sum/sq: (1, C_PAD) f32 resident accumulators (same block for every grid i).
    """
    @pl.when(pl.program_id(0) == 0)
    def _init():
        sum_ref[...] = jnp.zeros_like(sum_ref)
        sq_ref[...] = jnp.zeros_like(sq_ref)

    y = jnp.dot(p_ref[...], w_ref[...], preferred_element_type=jnp.float32)
    y_ref[...] = y
    sum_ref[...] += jnp.sum(y, axis=0, keepdims=True)
    sq_ref[...] += jnp.sum(y * y, axis=0, keepdims=True)


def _bn_relu_kernel(y_ref, scale_ref, shift_ref, o_ref):
    """Pass 2: out = relu(y * scale + shift) per tile (scale/shift fold BN)."""
    o_ref[...] = jnp.maximum(y_ref[...] * scale_ref[...] + shift_ref[...], 0.0)


def _im2col(xp, k, ho, wo):
    """Stride-1 patches of xp (N, C, Hp, Wp) -> (N*ho*wo, C*k*k).

    K ordering is C outer then (i*k + j), matching w.reshape(Cout, C*k*k).
    """
    n, c, _, _ = xp.shape
    cols = []
    for i in range(k):
        for j in range(k):
            cols.append(xp[:, :, i:i + ho, j:j + wo])   # (N, C, ho, wo)
    cols = jnp.stack(cols, axis=0)                      # (k*k, N, C, ho, wo)
    cols = jnp.transpose(cols, (1, 3, 4, 2, 0))         # (N, ho, wo, C, k*k)
    return cols.reshape(n * ho * wo, c * k * k)


@functools.partial(jax.jit, static_argnames=("kernel_size", "stride"))
def deconv2d_bn_relu(x, weight, gamma, beta, *, kernel_size, stride):
    """Forward of Deconv2d (ConvTranspose2d bias=False -> crop -> BN -> ReLU).

    x:      (N, Cin, H, W) float32, NCHW
    weight: (Cin, Cout, k, k)   -- PyTorch ConvTranspose2d layout
    gamma, beta: (Cout,)        -- BatchNorm2d affine
    returns (N, Cout, Ho, Wo) float32 (NCHW)
    """
    k = kernel_size
    s = stride
    n, cin, h, w = x.shape
    cout = weight.shape[1]

    # --- ConvTranspose2d == stride-1 conv over the zero-dilated, (k-1)-padded
    #     input with the spatially flipped, channel-transposed weight. ---
    hd, wd = (h - 1) * s + 1, (w - 1) * s + 1
    x_bf = x.astype(jnp.bfloat16)                       # bf16 MXU operands
    xd = jnp.zeros((n, cin, hd, wd), jnp.bfloat16).at[:, :, ::s, ::s].set(x_bf)
    xp = jnp.pad(xd, ((0, 0), (0, 0), (k - 1, k - 1), (k - 1, k - 1)))

    ho_full, wo_full = hd + k - 1, wd + k - 1           # (H-1)*s + k
    ho = min(ho_full, s * h) if s == 2 else ho_full     # module crops to 2H x 2W
    wo = min(wo_full, s * w) if s == 2 else wo_full

    w_conv = jnp.transpose(weight, (1, 0, 2, 3))[:, :, ::-1, ::-1]  # (Cout,Cin,k,k)

    # TODO(synk): form patch tiles in-kernel from xp (k*k shifted matmuls over a
    # pl.ANY input) to remove the k*k HBM duplication of the im2col below.
    patches = _im2col(xp, k, ho, wo)                    # (M, K) bf16
    m, kdim = patches.shape

    m_pad = ((m + TILE_M - 1) // TILE_M) * TILE_M
    if m_pad != m:
        patches = jnp.pad(patches, ((0, m_pad - m), (0, 0)))  # zero rows: no
        # effect on the stats accumulators (they contribute exactly 0).
    n_tiles = m_pad // TILE_M

    # Lane-dense (128) output channels; padded channels get zero weight.
    w_mat = jnp.zeros((kdim, C_PAD), jnp.bfloat16)
    w_mat = w_mat.at[:, :cout].set(
        w_conv.reshape(cout, kdim).T.astype(jnp.bfloat16))

    # ---------------- Pass 1: tiled matmul + global BN statistics ------------
    bytes1 = (m_pad * kdim * 2 + kdim * C_PAD * 2
              + m_pad * C_PAD * 4 + 2 * C_PAD * 4)
    y_flat, ssum, ssq = pl.pallas_call(
        _matmul_stats_kernel,
        out_shape=(
            jax.ShapeDtypeStruct((m_pad, C_PAD), jnp.float32),
            jax.ShapeDtypeStruct((1, C_PAD), jnp.float32),
            jax.ShapeDtypeStruct((1, C_PAD), jnp.float32),
        ),
        grid=(n_tiles,),
        in_specs=[
            pl.BlockSpec((TILE_M, kdim), lambda i: (i, 0)),
            pl.BlockSpec((kdim, C_PAD), lambda i: (0, 0)),
        ],
        out_specs=(
            pl.BlockSpec((TILE_M, C_PAD), lambda i: (i, 0)),
            pl.BlockSpec((1, C_PAD), lambda i: (0, 0)),
            pl.BlockSpec((1, C_PAD), lambda i: (0, 0)),
        ),
        compiler_params=pltpu.CompilerParams(
            dimension_semantics=("arbitrary",),   # stats accumulate across tiles
            vmem_limit_bytes=_VMEM_LIMIT),
        cost_estimate=pl.CostEstimate(
            flops=2 * m_pad * kdim * C_PAD,
            transcendentals=0,
            bytes_accessed=bytes1),
    )(patches, w_mat)

    # ------- Fold BN (training-mode batch stats) into scale/shift (tiny XLA) --
    inv_m = 1.0 / float(m)                       # real rows only (not padding)
    mean = ssum[0] * inv_m                       # (C_PAD,)
    var = jnp.maximum(ssq[0] * inv_m - mean * mean, 0.0)   # biased variance
    inv_std = jax.lax.rsqrt(var + jnp.float32(1e-5))
    g_pad = jnp.zeros((C_PAD,), jnp.float32).at[:cout].set(gamma.astype(jnp.float32))
    b_pad = jnp.zeros((C_PAD,), jnp.float32).at[:cout].set(beta.astype(jnp.float32))
    scale = (g_pad * inv_std).reshape(1, C_PAD)
    shift = (b_pad - mean * g_pad * inv_std).reshape(1, C_PAD)

    # ---------------- Pass 2: normalize + ReLU (parallel over tiles) ---------
    bytes2 = 2 * m_pad * C_PAD * 4 + 2 * C_PAD * 4
    out_flat = pl.pallas_call(
        _bn_relu_kernel,
        out_shape=jax.ShapeDtypeStruct((m_pad, C_PAD), jnp.float32),
        grid=(n_tiles,),
        in_specs=[
            pl.BlockSpec((TILE_M, C_PAD), lambda i: (i, 0)),
            pl.BlockSpec((1, C_PAD), lambda i: (0, 0)),
            pl.BlockSpec((1, C_PAD), lambda i: (0, 0)),
        ],
        out_specs=pl.BlockSpec((TILE_M, C_PAD), lambda i: (i, 0)),
        compiler_params=pltpu.CompilerParams(
            dimension_semantics=("parallel",),    # independent tiles (megacore)
            vmem_limit_bytes=_VMEM_LIMIT),
        cost_estimate=pl.CostEstimate(
            flops=3 * m_pad * C_PAD,
            transcendentals=0,
            bytes_accessed=bytes2),
    )(y_flat, scale, shift)

    # Slice off M / channel padding; keep module-faithful NCHW output.
    # (The NCHW transpose could be dropped/fused if the consumer takes NHWC.)
    out = out_flat[:m, :cout].reshape(n, ho, wo, cout).transpose(0, 3, 1, 2)
    return out


# ------------------------- independent pure-JAX reference --------------------
def _reference_deconv(x, weight, stride):
    """Direct scatter definition of ConvTranspose2d (padding=0, bias=False)."""
    n, cin, h, w = x.shape
    cout, k = weight.shape[1], weight.shape[2]
    ho, wo = (h - 1) * stride + k, (w - 1) * stride + k
    y = jnp.zeros((n, cout, ho, wo), jnp.float32)
    for a in range(k):
        for b in range(k):
            contrib = jnp.einsum("nihw,io->nohw", x, weight[:, :, a, b])
            y = y.at[:, :, a:a + stride * h:stride, b:b + stride * w:stride].add(contrib)
    return y


def _reference(x, weight, gamma, beta, stride):
    y = _reference_deconv(x.astype(jnp.float32), weight.astype(jnp.float32), stride)
    if stride == 2:
        y = y[:, :, :2 * x.shape[2], :2 * x.shape[3]]
    mean = jnp.mean(y, axis=(0, 2, 3), keepdims=True)
    var = jnp.mean((y - mean) ** 2, axis=(0, 2, 3), keepdims=True)
    yn = (y - mean) * jax.lax.rsqrt(var + 1e-5)
    yn = yn * gamma.reshape(1, -1, 1, 1) + beta.reshape(1, -1, 1, 1)
    return jnp.maximum(yn, 0.0)


if __name__ == "__main__":
    # Deconv2d(4, 8, kernel_size=3) exercised at both strides supported (1, 2).
    N, Cin, H, W = 2, 4, 16, 16
    Cout, K = 8, 3

    key = jax.random.PRNGKey(0)
    kx, kw = jax.random.split(key)
    x = jax.random.normal(kx, (N, Cin, H, W), dtype=jnp.float32)

    # ConvTranspose2d weight layout (Cin, Cout, k, k); deterministic xavier_uniform.
    fan_in, fan_out = Cout * K * K, Cin * K * K
    bound = (6.0 / (fan_in + fan_out)) ** 0.5
    weight = jax.random.uniform(kw, (Cin, Cout, K, K), minval=-bound, maxval=bound,
                                dtype=jnp.float32)

    # init_bn: gamma = 1, beta = 0.
    gamma = jnp.ones((Cout,), jnp.float32)
    beta = jnp.zeros((Cout,), jnp.float32)

    for stride in (2, 1):
        out = deconv2d_bn_relu(x, weight, gamma, beta, kernel_size=K, stride=stride)
        out = jax.block_until_ready(out)
        ref = _reference(x, weight, gamma, beta, stride)

        if stride == 2:
            assert out.shape == (N, Cout, 2 * H, 2 * W)
        else:
            assert out.shape == (N, Cout, H + K - 1, W + K - 1)
        assert out.shape == ref.shape
        # bf16 MXU operands -> slightly looser tolerance than pure-f32.
        assert jnp.allclose(out, ref, atol=3e-2, rtol=3e-2), float(
            jnp.max(jnp.abs(out - ref)))

    print("KERNEL_OK")
</pallas_src>

<mosaic_0001>
module attributes {stable_mosaic.version = 11 : i64} {
  func.func @_matmul_stats_kernel(%arg0: i32, %arg1: memref<512x36xbf16, #tpu.memory_space<vmem>>, %arg2: memref<36x128xbf16, #tpu.memory_space<vmem>>, %arg3: memref<512x128xf32, #tpu.memory_space<vmem>>, %arg4: memref<1x128xf32, #tpu.memory_space<vmem>>, %arg5: memref<1x128xf32, #tpu.memory_space<vmem>>) attributes {dimension_semantics = [#tpu.dimension_semantics<arbitrary>], iteration_bounds = array<i64: 4>, scalar_prefetch = 0 : i64, scratch_operands = 0 : i64, tpu.core_type = #tpu.core_type<tc>, window_params = [{transform_indices = @transform_0, window_bounds = array<i64: 512, 36>}, {pipeline_mode = #tpu.pipeline_mode<synchronous>, transform_indices = @transform_1, window_bounds = array<i64: 36, 128>}, {transform_indices = @transform_2, window_bounds = array<i64: 512, 128>}, {pipeline_mode = #tpu.pipeline_mode<synchronous>, transform_indices = @transform_3, window_bounds = array<i64: 1, 128>}, {pipeline_mode = #tpu.pipeline_mode<synchronous>, transform_indices = @transform_4, window_bounds = array<i64: 1, 128>}]} {
    %c0_i32 = arith.constant 0 : i32
    %0 = arith.cmpi eq, %arg0, %c0_i32 : i32
    %1 = arith.extui %0 : i1 to i32
    %c0_i32_0 = arith.constant 0 : i32
    %2 = arith.cmpi ne, %1, %c0_i32_0 : i32
    scf.if %2 {
      %cst_16 = arith.constant 0.000000e+00 : f32
      %18 = vector.broadcast %cst_16 : f32 to vector<1x128xf32>
      %c0_17 = arith.constant 0 : index
      %c0_18 = arith.constant 0 : index
      %19 = vector.load %arg4[%c0_17, %c0_18] : memref<1x128xf32, #tpu.memory_space<vmem>>, vector<1x128xf32>
      tpu.vector_store %arg4[%c0_17, %c0_18], %18 {strides = array<i32>} : memref<1x128xf32, #tpu.memory_space<vmem>>, vector<1x128xf32>,
      %cst_19 = arith.constant 0.000000e+00 : f32
      %20 = vector.broadcast %cst_19 : f32 to vector<1x128xf32>
      %c0_20 = arith.constant 0 : index
      %c0_21 = arith.constant 0 : index
      %21 = vector.load %arg5[%c0_20, %c0_21] : memref<1x128xf32, #tpu.memory_space<vmem>>, vector<1x128xf32>
      tpu.vector_store %arg5[%c0_20, %c0_21], %20 {strides = array<i32>} : memref<1x128xf32, #tpu.memory_space<vmem>>, vector<1x128xf32>,
    } else {
    }
    %c0 = arith.constant 0 : index
    %c0_1 = arith.constant 0 : index
    %3 = vector.load %arg1[%c0, %c0_1] : memref<512x36xbf16, #tpu.memory_space<vmem>>, vector<512x36xbf16>
    %c0_2 = arith.constant 0 : index
    %c0_3 = arith.constant 0 : index
    %4 = vector.load %arg2[%c0_2, %c0_3] : memref<36x128xbf16, #tpu.memory_space<vmem>>, vector<36x128xbf16>
    %cst = arith.constant dense<0.000000e+00> : vector<512x128xf32>
    %5 = tpu.matmul %3, %4, %cst {dimension_numbers = #tpu.dot_dimension_numbers<[1], [0], [0], [1], [0, 0, 1, 1], [], []>} : vector<512x36xbf16>, vector<36x128xbf16>, vector<512x128xf32> -> vector<512x128xf32>
    %c0_4 = arith.constant 0 : index
    %c0_5 = arith.constant 0 : index
    %6 = vector.load %arg3[%c0_4, %c0_5] : memref<512x128xf32, #tpu.memory_space<vmem>>, vector<512x128xf32>
    tpu.vector_store %arg3[%c0_4, %c0_5], %5 {strides = array<i32>} : memref<512x128xf32, #tpu.memory_space<vmem>>, vector<512x128xf32>,
    %c0_6 = arith.constant 0 : index
    %c0_7 = arith.constant 0 : index
    %7 = vector.load %arg4[%c0_6, %c0_7] : memref<1x128xf32, #tpu.memory_space<vmem>>, vector<1x128xf32>
    %cst_8 = arith.constant dense<0.000000e+00> : vector<128xf32>
    %8 = vector.multi_reduction <add>, %5, %cst_8 [0] : vector<512x128xf32> to vector<128xf32>
    %9 = vector.shape_cast %8 : vector<128xf32> to vector<1x128xf32>
    %10 = arith.addf %7, %9 : vector<1x128xf32>
    %c0_9 = arith.constant 0 : index
    %c0_10 = arith.constant 0 : index
    %11 = vector.load %arg4[%c0_9, %c0_10] : memref<1x128xf32, #tpu.memory_space<vmem>>, vector<1x128xf32>
    tpu.vector_store %arg4[%c0_9, %c0_10], %10 {strides = array<i32>} : memref<1x128xf32, #tpu.memory_space<vmem>>, vector<1x128xf32>,
    %c0_11 = arith.constant 0 : index
    %c0_12 = arith.constant 0 : index
    %12 = vector.load %arg5[%c0_11, %c0_12] : memref<1x128xf32, #tpu.memory_space<vmem>>, vector<1x128xf32>
    %13 = arith.mulf %5, %5 : vector<512x128xf32>
    %cst_13 = arith.constant dense<0.000000e+00> : vector<128xf32>
    %14 = vector.multi_reduction <add>, %13, %cst_13 [0] : vector<512x128xf32> to vector<128xf32>
    %15 = vector.shape_cast %14 : vector<128xf32> to vector<1x128xf32>
    %16 = arith.addf %12, %15 : vector<1x128xf32>
    %c0_14 = arith.constant 0 : index
    %c0_15 = arith.constant 0 : index
    %17 = vector.load %arg5[%c0_14, %c0_15] : memref<1x128xf32, #tpu.memory_space<vmem>>, vector<1x128xf32>
    tpu.vector_store %arg5[%c0_14, %c0_15], %16 {strides = array<i32>} : memref<1x128xf32, #tpu.memory_space<vmem>>, vector<1x128xf32>,
    return
  }
  func.func @transform_0(%arg0: i32) -> (i32, i32) {
    %c0_i32 = arith.constant 0 : i32
    %c0_i32_0 = arith.constant 0 : i32
    return %arg0, %c0_i32 : i32, i32
  }
  func.func @transform_1(%arg0: i32) -> (i32, i32) {
    %c0_i32 = arith.constant 0 : i32
    %c0_i32_0 = arith.constant 0 : i32
    %c0_i32_1 = arith.constant 0 : i32
    return %c0_i32, %c0_i32_0 : i32, i32
  }
  func.func @transform_2(%arg0: i32) -> (i32, i32) {
    %c0_i32 = arith.constant 0 : i32
    %c0_i32_0 = arith.constant 0 : i32
    return %arg0, %c0_i32 : i32, i32
  }
  func.func @transform_3(%arg0: i32) -> (i32, i32) {
    %c0_i32 = arith.constant 0 : i32
    %c0_i32_0 = arith.constant 0 : i32
    %c0_i32_1 = arith.constant 0 : i32
    return %c0_i32, %c0_i32_0 : i32, i32
  }
  func.func @transform_4(%arg0: i32) -> (i32, i32) {
    %c0_i32 = arith.constant 0 : i32
    %c0_i32_0 = arith.constant 0 : i32
    %c0_i32_1 = arith.constant 0 : i32
    return %c0_i32, %c0_i32_0 : i32, i32
  }
}

module attributes {stable_mosaic.version = 11 : i64} {
  func.func @_bn_relu_kernel(%arg0: i32, %arg1: memref<512x128xf32, #tpu.memory_space<vmem>>, %arg2: memref<1x128xf32, #tpu.memory_space<vmem>>, %arg3: memref<1x128xf32, #tpu.memory_space<vmem>>, %arg4: memref<512x128xf32, #tpu.memory_space<vmem>>) attributes {dimension_semantics = [#tpu.dimension_semantics<parallel>], iteration_bounds = array<i64: 4>, scalar_prefetch = 0 : i64, scratch_operands = 0 : i64, tpu.core_type = #tpu.core_type<tc>, window_params = [{transform_indices = @transform_0, window_bounds = array<i64: 512, 128>}, {pipeline_mode = #tpu.pipeline_mode<synchronous>, transform_indices = @transform_1, window_bounds = array<i64: 1, 128>}, {pipeline_mode = #tpu.pipeline_mode<synchronous>, transform_indices = @transform_2, window_bounds = array<i64: 1, 128>}, {transform_indices = @transform_3, window_bounds = array<i64: 512, 128>}]} {
    %c0 = arith.constant 0 : index
    %c0_0 = arith.constant 0 : index
    %0 = vector.load %arg1[%c0, %c0_0] : memref<512x128xf32, #tpu.memory_space<vmem>>, vector<512x128xf32>
    %c0_1 = arith.constant 0 : index
    %c0_2 = arith.constant 0 : index
    %1 = vector.load %arg2[%c0_1, %c0_2] : memref<1x128xf32, #tpu.memory_space<vmem>>, vector<1x128xf32>
    %2 = vector.broadcast %1 : vector<1x128xf32> to vector<512x128xf32>
    %3 = arith.mulf %0, %2 : vector<512x128xf32>
    %c0_3 = arith.constant 0 : index
    %c0_4 = arith.constant 0 : index
    %4 = vector.load %arg3[%c0_3, %c0_4] : memref<1x128xf32, #tpu.memory_space<vmem>>, vector<1x128xf32>
    %5 = vector.broadcast %4 : vector<1x128xf32> to vector<512x128xf32>
    %6 = arith.addf %3, %5 : vector<512x128xf32>
    %cst = arith.constant 0.000000e+00 : f32
    %7 = vector.broadcast %cst : f32 to vector<512x128xf32>
    %8 = arith.maximumf %6, %7 : vector<512x128xf32>
    %c0_5 = arith.constant 0 : index
    %c0_6 = arith.constant 0 : index
    %9 = vector.load %arg4[%c0_5, %c0_6] : memref<512x128xf32, #tpu.memory_space<vmem>>, vector<512x128xf32>
    tpu.vector_store %arg4[%c0_5, %c0_6], %8 {strides = array<i32>} : memref<512x128xf32, #tpu.memory_space<vmem>>, vector<512x128xf32>,
    return
  }
  func.func @transform_0(%arg0: i32) -> (i32, i32) {
    %c0_i32 = arith.constant 0 : i32
    %c0_i32_0 = arith.constant 0 : i32
    return %arg0, %c0_i32 : i32, i32
  }
  func.func @transform_1(%arg0: i32) -> (i32, i32) {
    %c0_i32 = arith.constant 0 : i32
    %c0_i32_0 = arith.constant 0 : i32
    %c0_i32_1 = arith.constant 0 : i32
    return %c0_i32, %c0_i32_0 : i32, i32
  }
  func.func @transform_2(%arg0: i32) -> (i32, i32) {
    %c0_i32 = arith.constant 0 : i32
    %c0_i32_0 = arith.constant 0 : i32
    %c0_i32_1 = arith.constant 0 : i32
    return %c0_i32, %c0_i32_0 : i32, i32
  }
  func.func @transform_3(%arg0: i32) -> (i32, i32) {
    %c0_i32 = arith.constant 0 : i32
    %c0_i32_0 = arith.constant 0 : i32
    return %arg0, %c0_i32 : i32, i32
  }
}

</mosaic_0001>

<llo_original>
// kernel: deconv2d_bn_relu.3
$region0: #{deconv2d_bn_relu.3}
  #allocation0 [shape = 'u32[]', space=smem, size = 0x4, offset = 0x4, fixed_abs, tag = 'smem constant byte address 0x4 - core index']
  #allocation1 [shape = 'u32[72,128]{1,0:T(1,128)}', space=vmem, size = 0x9000, scoped, tag = 'internal scratch']
  %s0 = inlined_call_operand.vmem [shape: f32[2048,128], index: 0, kind: input, shape index: {}]
  %s1 = inlined_call_operand.vmem [shape: f32[1,128], index: 1, kind: input, shape index: {}]
  %s2 = inlined_call_operand.vmem [shape: f32[1,128], index: 2, kind: input, shape index: {}]
  %s3 = inlined_call_operand.vmem [shape: f32[2048,128], index: 3, kind: output, shape index: {}]
  %s4 = sld [smem:[#allocation0]]
  $region45: #{deconv2d_bn_relu.3} parent=0
    _
  %s6 = ssub.s32 1, %s4
  %s7 = scalar_select 0, %s6, %s4
  loop: start=0, step=1, limit=6
  $region2: #{deconv2d_bn_relu.3} parent=0 // loop_pre_header
    _
  $region3: #{deconv2d_bn_relu.3} parent=0 // loop_header
    %s9 = sphi 0, %s13
    %p10 = scmp.ge.s32.totalorder %s9, 6
    %s19 = sphi 0, %s21
    %s22 = sphi 0, %s19
    %s23 = sphi 0, %s22
    %s39 = sphi 0, %s23
    %s43 = sphi 0, %s43
    %s45 = sphi 0, %s43
    %s46 = sphi 0, %s45
    %s60 = sphi 0, %s46
    %s64 = sphi 0, %s64
    %s66 = sphi 0, %s64
    %s67 = sphi 0, %s66
    %s81 = sphi 0, %s67
    %s87 = sphi 0, %s89
    %s90 = sphi 0, %s87
    %s91 = sphi 0, %s90
    %s107 = sphi 0, %s91
  $region4: #{deconv2d_bn_relu.3} parent=0 // loop_header_branch
    %12 = sbr.rel (%p10) target = $region8
  $region5: #{deconv2d_bn_relu.3} parent=0 // loop_body
    %s14 = ssub.s32 %s9, 1
    %s15 = ssub.s32 %s9, 2
    %s16 = sadd.s32 %s9, 1
    %s17 = ssub.s32 %s9, %s16
    %p18 = scmp.eq.s32.totalorder %s17, 0
    %s20 = sadd.s32 %s19, 1
    %s21 = scalar_select %p18, %s19, %s20
    %p24 = pneg %p18
    %p25 = scmp.eq.s32.totalorder %s9, 3
    %p26 = por %p24, %p25
    %p27 = scmp.ne.s32.totalorder %s19, %s22
    %p28 = scmp.eq.s32.totalorder %s9, 0
    %p29 = por %p27, %p28
    %p30 = scmp.ne.s32.totalorder %s19, %s22
    %p31 = scmp.eq.s32.totalorder %s14, 3
    %p32 = por %p30, %p31
    %p33 = scmp.ne.s32.totalorder %s22, %s23
    %p34 = scmp.eq.s32.totalorder %s14, 0
    %p35 = por %p33, %p34
    %p36 = scmp.ne.s32.totalorder %s22, %s23
    %p37 = scmp.eq.s32.totalorder %s15, 3
    %p38 = por %p36, %p37
    %p40 = scmp.ne.s32.totalorder %s23, %s39
    %p41 = scmp.eq.s32.totalorder %s15, 0
    %p42 = por %p40, %p41
    %s44 = sadd.s32 %s43, 1
    %p47 = scmp.eq.s32.totalorder %s9, 3
    %p48 = scmp.ne.s32.totalorder %s43, %s45
    %p49 = scmp.eq.s32.totalorder %s9, 0
    %p50 = por %p48, %p49
    %p51 = scmp.ne.s32.totalorder %s43, %s45
    %p52 = scmp.eq.s32.totalorder %s14, 3
    %p53 = por %p51, %p52
    %p54 = scmp.ne.s32.totalorder %s45, %s46
    %p55 = scmp.eq.s32.totalorder %s14, 0
    %p56 = por %p54, %p55
    %p57 = scmp.ne.s32.totalorder %s45, %s46
    %p58 = scmp.eq.s32.totalorder %s15, 3
    %p59 = por %p57, %p58
    %p61 = scmp.ne.s32.totalorder %s46, %s60
    %p62 = scmp.eq.s32.totalorder %s15, 0
    %p63 = por %p61, %p62
    %s65 = sadd.s32 %s64, 1
    %p68 = scmp.eq.s32.totalorder %s9, 3
    %p69 = scmp.ne.s32.totalorder %s64, %s66
    %p70 = scmp.eq.s32.totalorder %s9, 0
    %p71 = por %p69, %p70
    %p72 = scmp.ne.s32.totalorder %s64, %s66
    %p73 = scmp.eq.s32.totalorder %s14, 3
    %p74 = por %p72, %p73
    %p75 = scmp.ne.s32.totalorder %s66, %s67
    %p76 = scmp.eq.s32.totalorder %s14, 0
    %p77 = por %p75, %p76
    %p78 = scmp.ne.s32.totalorder %s66, %s67
    %p79 = scmp.eq.s32.totalorder %s15, 3
    %p80 = por %p78, %p79
    %p82 = scmp.ne.s32.totalorder %s67, %s81
    %p83 = scmp.eq.s32.totalorder %s15, 0
    %p84 = por %p82, %p83
    %s85 = ssub.s32 %s9, %s16
    %p86 = scmp.eq.s32.totalorder %s85, 0
    %s88 = sadd.s32 %s87, 1
    %s89 = scalar_select %p86, %s87, %s88
    %p92 = pneg %p86
    %p93 = scmp.eq.s32.totalorder %s9, 3
    %p94 = por %p92, %p93
    %p95 = scmp.ne.s32.totalorder %s87, %s90
    %p96 = scmp.eq.s32.totalorder %s9, 0
    %p97 = por %p95, %p96
    %p98 = scmp.ne.s32.totalorder %s87, %s90
    %p99 = scmp.eq.s32.totalorder %s14, 3
    %p100 = por %p98, %p99
    %p101 = scmp.ne.s32.totalorder %s90, %s91
    %p102 = scmp.eq.s32.totalorder %s14, 0
    %p103 = por %p101, %p102
    %p104 = scmp.ne.s32.totalorder %s90, %s91
    %p105 = scmp.eq.s32.totalorder %s15, 3
    %p106 = por %p104, %p105
    %p108 = scmp.ne.s32.totalorder %s91, %s107
    %p109 = scmp.eq.s32.totalorder %s15, 0
    %p110 = por %p108, %p109
    %p111 = scmp.le.s32.totalorder 1, %s9
    %p112 = scmp.lt.s32.totalorder %s9, 5
    %p113 = pnand %p111, %p112
    %p114 = pneg %p113
    // Predicated region
    $region9: #{deconv2d_bn_relu.3} parent=5 // pred_check
      _
    $region10: #{deconv2d_bn_relu.3} parent=5 // pred_check_branch
      %116 = sbr.rel (%p113) target = $region12
    $region11: #{deconv2d_bn_relu.3} parent=5 // pred_region
      %s117 = ssub.s32 %s9, 1
      // Predicated region
      $region13: #{deconv2d_bn_relu.3} parent=11 // pred_check
        %p118 = pneg %p56
      $region14: #{deconv2d_bn_relu.3} parent=11 // pred_check_branch
        %120 = sbr.rel (%p118) target = $region16
      $region15: #{deconv2d_bn_relu.3} parent=11 // pred_region
        _
      $region16: #{deconv2d_bn_relu.3} parent=11 // pred_fallthru
        _
      // Predicated region
      $region17: #{deconv2d_bn_relu.3} parent=11 // pred_check
        %p121 = pneg %p77
      $region18: #{deconv2d_bn_relu.3} parent=11 // pred_check_branch
        %123 = sbr.rel (%p121) target = $region20
      $region19: #{deconv2d_bn_relu.3} parent=11 // pred_region
        _
      $region20: #{deconv2d_bn_relu.3} parent=11 // pred_fallthru
        _
    $region12: #{deconv2d_bn_relu.3} parent=5 // pred_fallthru
      _
    %p124 = scmp.lt.s32.totalorder %s9, 4
    // Predicated region
    $region21: #{deconv2d_bn_relu.3} parent=5 // pred_check
      %p125 = pneg %p124
    $region22: #{deconv2d_bn_relu.3} parent=5 // pred_check_branch
      %127 = sbr.rel (%p125) target = $region24
    $region23: #{deconv2d_bn_relu.3} parent=5 // pred_region
      // Predicated region
      $region25: #{deconv2d_bn_relu.3} parent=23 // pred_check
        %p128 = pneg %p29
      $region26: #{deconv2d_bn_relu.3} parent=23 // pred_check_branch
        %130 = sbr.rel (%p128) target = $region28
      $region27: #{deconv2d_bn_relu.3} parent=23 // pred_region
        %s131 = smul.u32 64, %s9
        %p132 = scmp.lt.s32.totalorder %s131, 255
        %s133 = scalar_select %p132, %s131, 255
        %s134 = smul.addr %s133, 8
        %s135 = scalar_lea.vmem %s0, %s134
        %s136 = smul.u32 64, %s9
      $region28: #{deconv2d_bn_relu.3} parent=23 // pred_fallthru
        _
    $region24: #{deconv2d_bn_relu.3} parent=5 // pred_fallthru
      _
    %p137 = scmp.le.s32.totalorder 1, %s9
    %p138 = scmp.lt.s32.totalorder %s9, 5
    %p139 = pnand %p137, %p138
    %p140 = pneg %p139
    // Predicated region
    $region29: #{deconv2d_bn_relu.3} parent=5 // pred_check
      _
    $region30: #{deconv2d_bn_relu.3} parent=5 // pred_check_branch
      %142 = sbr.rel (%p139) target = $region32
    $region31: #{deconv2d_bn_relu.3} parent=5 // pred_region
      %s143 = ssub.s32 %s9, 1
      %s144 = smul.u32 64, %s14
      %p145 = scmp.lt.s32.totalorder %s144, 255
      %s146 = scalar_select %p145, %s144, 255
      %s147 = smul.addr %s146, 8
      %s148 = scalar_lea.vmem %s0, %s147
      %p149 = pneg %p35
      %p150 = pneg %p32
      %p151 = pneg %p56
      %p152 = pneg %p53
      %p153 = pneg %p77
      %p154 = pneg %p74
      %p155 = pneg %p103
      %p156 = pneg %p100
      %s157 = smul.u32 64, %s14
      %p158 = scmp.lt.s32.totalorder %s157, 255
      %s159 = scalar_select %p158, %s157, 255
      %s160 = smul.addr %s159, 8
      %s161 = scalar_lea.vmem %s3, %s160
      %s162 = smul.u32 64, %s14
      %p163 = scmp.lt.s32.totalorder %s162, 255
      %s164 = scalar_select %p163, %s162, 255
      %s165 = smul.addr %s164, 8
      %s166 = scalar_lea.vmem %s0, %s165
      %s167 = smul.u32 64, %s14
      %s168 = smul.u32 64, %s14
      %p169 = scmp.lt.s32.totalorder %s168, 255
      %s170 = scalar_select %p169, %s168, 255
      %s171 = smul.addr %s170, 8
      %s172 = scalar_lea.vmem %s3, %s171
      %s173 = smul.u32 64, %s14
      %v174 = vld [vmem:[%s166] sm:$0xff]
      %v175 = vld [vmem:[%s166 + $0x8] sm:$0xff]
      %v176 = vld [vmem:[%s166 + $0x10] sm:$0xff]
      %v177 = vld [vmem:[%s166 + $0x18] sm:$0xff]
      %v178 = vld [vmem:[%s166 + $0x20] sm:$0xff]
      %v179 = vld [vmem:[%s166 + $0x28] sm:$0xff]
      %v180 = vld [vmem:[%s166 + $0x30] sm:$0xff]
      %v181 = vld [vmem:[%s166 + $0x38] sm:$0xff]
      %v182 = vld [vmem:[%s166 + $0x40] sm:$0xff]
      %v183 = vld [vmem:[%s166 + $0x48] sm:$0xff]
      %v184 = vld [vmem:[%s166 + $0x50] sm:$0xff]
      %v185 = vld [vmem:[%s166 + $0x58] sm:$0xff]
      %v186 = vld [vmem:[%s166 + $0x60] sm:$0xff]
      %v187 = vld [vmem:[%s166 + $0x68] sm:$0xff]
      %v188 = vld [vmem:[%s166 + $0x70] sm:$0xff]
      %v189 = vld [vmem:[%s166 + $0x78] sm:$0xff]
      %v190 = vld [vmem:[%s166 + $0x80] sm:$0xff]
      %v191 = vld [vmem:[%s166 + $0x88] sm:$0xff]
      %v192 = vld [vmem:[%s166 + $0x90] sm:$0xff]
      %v193 = vld [vmem:[%s166 + $0x98] sm:$0xff]
      %v194 = vld [vmem:[%s166 + $0xa0] sm:$0xff]
      %v195 = vld [vmem:[%s166 + $0xa8] sm:$0xff]
      %v196 = vld [vmem:[%s166 + $0xb0] sm:$0xff]
      %v197 = vld [vmem:[%s166 + $0xb8] sm:$0xff]
      %v198 = vld [vmem:[%s166 + $0xc0] sm:$0xff]
      %v199 = vld [vmem:[%s166 + $0xc8] sm:$0xff]
      %v200 = vld [vmem:[%s166 + $0xd0] sm:$0xff]
      %v201 = vld [vmem:[%s166 + $0xd8] sm:$0xff]
      %v202 = vld [vmem:[%s166 + $0xe0] sm:$0xff]
      %v203 = vld [vmem:[%s166 + $0xe8] sm:$0xff]
      %v204 = vld [vmem:[%s166 + $0xf0] sm:$0xff]
      %v205 = vld [vmem:[%s166 + $0xf8] sm:$0xff]
      %v206 = vld [vmem:[%s166 + $0x100] sm:$0xff]
      %v207 = vld [vmem:[%s166 + $0x108] sm:$0xff]
      %v208 = vld [vmem:[%s166 + $0x110] sm:$0xff]
      %v209 = vld [vmem:[%s166 + $0x118] sm:$0xff]
      %v210 = vld [vmem:[%s166 + $0x120] sm:$0xff]
      %v211 = vld [vmem:[%s166 + $0x128] sm:$0xff]
      %v212 = vld [vmem:[%s166 + $0x130] sm:$0xff]
      %v213 = vld [vmem:[%s166 + $0x138] sm:$0xff]
      %v214 = vld [vmem:[%s166 + $0x140] sm:$0xff]
      %v215 = vld [vmem:[%s166 + $0x148] sm:$0xff]
      %v216 = vld [vmem:[%s166 + $0x150] sm:$0xff]
      %v217 = vld [vmem:[%s166 + $0x158] sm:$0xff]
      %v218 = vld [vmem:[%s166 + $0x160] sm:$0xff]
      %v219 = vld [vmem:[%s166 + $0x168] sm:$0xff]
      %v220 = vld [vmem:[%s166 + $0x170] sm:$0xff]
      %v221 = vld [vmem:[%s166 + $0x178] sm:$0xff]
      %v222 = vld [vmem:[%s166 + $0x180] sm:$0xff]
      %v223 = vld [vmem:[%s166 + $0x188] sm:$0xff]
      %v224 = vld [vmem:[%s166 + $0x190] sm:$0xff]
      %v225 = vld [vmem:[%s166 + $0x198] sm:$0xff]
      %v226 = vld [vmem:[%s166 + $0x1a0] sm:$0xff]
      %v227 = vld [vmem:[%s166 + $0x1a8] sm:$0xff]
      %v228 = vld [vmem:[%s166 + $0x1b0] sm:$0xff]
      %v229 = vld [vmem:[%s166 + $0x1b8] sm:$0xff]
      %v230 = vld [vmem:[%s166 + $0x1c0] sm:$0xff]
      %v231 = vld [vmem:[%s166 + $0x1c8] sm:$0xff]
      %v232 = vld [vmem:[%s166 + $0x1d0] sm:$0xff]
      %v233 = vld [vmem:[%s166 + $0x1d8] sm:$0xff]
      %v234 = vld [vmem:[%s166 + $0x1e0] sm:$0xff]
      %v235 = vld [vmem:[%s166 + $0x1e8] sm:$0xff]
      %v236 = vld [vmem:[%s166 + $0x1f0] sm:$0xff]
      %v237 = vld [vmem:[%s166 + $0x1f8] sm:$0xff]
      %v238 = vld [vmem:[%s1] sm:$0x1]
      %v240 = vperm.slane %v238, 0
      %v242 = vmul.f32 %v174, %v240
      %v243 = vmul.f32 %v175, %v240
      %v244 = vmul.f32 %v176, %v240
      %v245 = vmul.f32 %v177, %v240
      %v246 = vmul.f32 %v178, %v240
      %v247 = vmul.f32 %v179, %v240
      %v248 = vmul.f32 %v180, %v240
      %v249 = vmul.f32 %v181, %v240
      %v250 = vmul.f32 %v182, %v240
      %v251 = vmul.f32 %v183, %v240
      %v252 = vmul.f32 %v184, %v240
      %v253 = vmul.f32 %v185, %v240
      %v254 = vmul.f32 %v186, %v240
      %v255 = vmul.f32 %v187, %v240
      %v256 = vmul.f32 %v188, %v240
      %v257 = vmul.f32 %v189, %v240
      %v258 = vmul.f32 %v190, %v240
      %v259 = vmul.f32 %v191, %v240
      %v260 = vmul.f32 %v192, %v240
      %v261 = vmul.f32 %v193, %v240
      %v262 = vmul.f32 %v194, %v240
      %v263 = vmul.f32 %v195, %v240
      %v264 = vmul.f32 %v196, %v240
      %v265 = vmul.f32 %v197, %v240
      %v266 = vmul.f32 %v198, %v240
      %v267 = vmul.f32 %v199, %v240
      %v268 = vmul.f32 %v200, %v240
      %v269 = vmul.f32 %v201, %v240
      %v270 = vmul.f32 %v202, %v240
      %v271 = vmul.f32 %v203, %v240
      %v272 = vmul.f32 %v204, %v240
      %v273 = vmul.f32 %v205, %v240
      %v274 = vmul.f32 %v206, %v240
      %v275 = vmul.f32 %v207, %v240
      %v276 = vmul.f32 %v208, %v240
      %v277 = vmul.f32 %v209, %v240
      %v278 = vmul.f32 %v210, %v240
      %v279 = vmul.f32 %v211, %v240
      %v280 = vmul.f32 %v212, %v240
      %v281 = vmul.f32 %v213, %v240
      %v282 = vmul.f32 %v214, %v240
      %v283 = vmul.f32 %v215, %v240
      %v284 = vmul.f32 %v216, %v240
      %v285 = vmul.f32 %v217, %v240
      %v286 = vmul.f32 %v218, %v240
      %v287 = vmul.f32 %v219, %v240
      %v288 = vmul.f32 %v220, %v240
      %v289 = vmul.f32 %v221, %v240
      %v290 = vmul.f32 %v222, %v240
      %v291 = vmul.f32 %v223, %v240
      %v292 = vmul.f32 %v224, %v240
      %v293 = vmul.f32 %v225, %v240
      %v294 = vmul.f32 %v226, %v240
      %v295 = vmul.f32 %v227, %v240
      %v296 = vmul.f32 %v228, %v240
      %v297 = vmul.f32 %v229, %v240
      %v298 = vmul.f32 %v230, %v240
      %v299 = vmul.f32 %v231, %v240
      %v300 = vmul.f32 %v232, %v240
      %v301 = vmul.f32 %v233, %v240
      %v302 = vmul.f32 %v234, %v240
      %v303 = vmul.f32 %v235, %v240
      %v304 = vmul.f32 %v236, %v240
      %v305 = vmul.f32 %v237, %v240
      %v306 = vld [vmem:[%s2] sm:$0x1]
      %v308 = vperm.slane %v306, 0
      %v310 = vadd.f32 %v242, %v308
      %v311 = vadd.f32 %v243, %v308
      %v312 = vadd.f32 %v244, %v308
      %v313 = vadd.f32 %v245, %v308
      %v314 = vadd.f32 %v246, %v308
      %v315 = vadd.f32 %v247, %v308
      %v316 = vadd.f32 %v248, %v308
      %v317 = vadd.f32 %v249, %v308
      %v318 = vadd.f32 %v250, %v308
      %v319 = vadd.f32 %v251, %v308
      %v320 = vadd.f32 %v252, %v308
      %v321 = vadd.f32 %v253, %v308
      %v322 = vadd.f32 %v254, %v308
      %v323 = vadd.f32 %v255, %v308
      %v324 = vadd.f32 %v256, %v308
      %v325 = vadd.f32 %v257, %v308
      %v326 = vadd.f32 %v258, %v308
      %v327 = vadd.f32 %v259, %v308
      %v328 = vadd.f32 %v260, %v308
      %v329 = vadd.f32 %v261, %v308
      %v330 = vadd.f32 %v262, %v308
      %v331 = vadd.f32 %v263, %v308
      %v332 = vadd.f32 %v264, %v308
      %v333 = vadd.f32 %v265, %v308
      %v334 = vadd.f32 %v266, %v308
      %v335 = vadd.f32 %v267, %v308
      %v336 = vadd.f32 %v268, %v308
      %v337 = vadd.f32 %v269, %v308
      %v338 = vadd.f32 %v270, %v308
      %v339 = vadd.f32 %v271, %v308
      %v340 = vadd.f32 %v272, %v308
      %v341 = vadd.f32 %v273, %v308
      %v342 = vadd.f32 %v274, %v308
      %v343 = vadd.f32 %v275, %v308
      %v344 = vadd.f32 %v276, %v308
      %v345 = vadd.f32 %v277, %v308
      %v346 = vadd.f32 %v278, %v308
      %v347 = vadd.f32 %v279, %v308
      %v348 = vadd.f32 %v280, %v308
      %v349 = vadd.f32 %v281, %v308
      %v350 = vadd.f32 %v282, %v308
      %v351 = vadd.f32 %v283, %v308
      %v352 = vadd.f32 %v284, %v308
      %v353 = vadd.f32 %v285, %v308
      %v354 = vadd.f32 %v286, %v308
      %v355 = vadd.f32 %v287, %v308
      %v356 = vadd.f32 %v288, %v308
      %v357 = vadd.f32 %v289, %v308
      %v358 = vadd.f32 %v290, %v308
      %v359 = vadd.f32 %v291, %v308
      %v360 = vadd.f32 %v292, %v308
      %v361 = vadd.f32 %v293, %v308
      %v362 = vadd.f32 %v294, %v308
      %v363 = vadd.f32 %v295, %v308
      %v364 = vadd.f32 %v296, %v308
      %v365 = vadd.f32 %v297, %v308
      %v366 = vadd.f32 %v298, %v308
      %v367 = vadd.f32 %v299, %v308
      %v368 = vadd.f32 %v300, %v308
      %v369 = vadd.f32 %v301, %v308
      %v370 = vadd.f32 %v302, %v308
      %v371 = vadd.f32 %v303, %v308
      %v372 = vadd.f32 %v304, %v308
      %v373 = vadd.f32 %v305, %v308
      %v374 = vmax.f32 %v310, 0.0
      %v375 = vmax.f32 %v311, 0.0
      %v376 = vmax.f32 %v312, 0.0
      %v377 = vmax.f32 %v313, 0.0
      %v378 = vmax.f32 %v314, 0.0
      %v379 = vmax.f32 %v315, 0.0
      %v380 = vmax.f32 %v316, 0.0
      %v381 = vmax.f32 %v317, 0.0
      %v382 = vmax.f32 %v318, 0.0
      %v383 = vmax.f32 %v319, 0.0
      %v384 = vmax.f32 %v320, 0.0
      %v385 = vmax.f32 %v321, 0.0
      %v386 = vmax.f32 %v322, 0.0
      %v387 = vmax.f32 %v323, 0.0
      %v388 = vmax.f32 %v324, 0.0
      %v389 = vmax.f32 %v325, 0.0
      %v390 = vmax.f32 %v326, 0.0
      %v391 = vmax.f32 %v327, 0.0
      %v392 = vmax.f32 %v328, 0.0
      %v393 = vmax.f32 %v329, 0.0
      %v394 = vmax.f32 %v330, 0.0
      %v395 = vmax.f32 %v331, 0.0
      %v396 = vmax.f32 %v332, 0.0
      %v397 = vmax.f32 %v333, 0.0
      %v398 = vmax.f32 %v334, 0.0
      %v399 = vmax.f32 %v335, 0.0
      %v400 = vmax.f32 %v336, 0.0
      %v401 = vmax.f32 %v337, 0.0
      %v402 = vmax.f32 %v338, 0.0
      %v403 = vmax.f32 %v339, 0.0
      %v404 = vmax.f32 %v340, 0.0
      %v405 = vmax.f32 %v341, 0.0
      %v406 = vmax.f32 %v342, 0.0
      %v407 = vmax.f32 %v343, 0.0
      %v408 = vmax.f32 %v344, 0.0
      %v409 = vmax.f32 %v345, 0.0
      %v410 = vmax.f32 %v346, 0.0
      %v411 = vmax.f32 %v347, 0.0
      %v412 = vmax.f32 %v348, 0.0
      %v413 = vmax.f32 %v349, 0.0
      %v414 = vmax.f32 %v350, 0.0
      %v415 = vmax.f32 %v351, 0.0
      %v416 = vmax.f32 %v352, 0.0
      %v417 = vmax.f32 %v353, 0.0
      %v418 = vmax.f32 %v354, 0.0
      %v419 = vmax.f32 %v355, 0.0
      %v420 = vmax.f32 %v356, 0.0
      %v421 = vmax.f32 %v357, 0.0
      %v422 = vmax.f32 %v358, 0.0
      %v423 = vmax.f32 %v359, 0.0
      %v424 = vmax.f32 %v360, 0.0
      %v425 = vmax.f32 %v361, 0.0
      %v426 = vmax.f32 %v362, 0.0
      %v427 = vmax.f32 %v363, 0.0
      %v428 = vmax.f32 %v364, 0.0
      %v429 = vmax.f32 %v365, 0.0
      %v430 = vmax.f32 %v366, 0.0
      %v431 = vmax.f32 %v367, 0.0
      %v432 = vmax.f32 %v368, 0.0
      %v433 = vmax.f32 %v369, 0.0
      %v434 = vmax.f32 %v370, 0.0
      %v435 = vmax.f32 %v371, 0.0
      %v436 = vmax.f32 %v372, 0.0
      %v437 = vmax.f32 %v373, 0.0
      %438 = vst [vmem:[%s172] sm:$0xff] %v374
      %439 = vst [vmem:[%s172 + $0x8] sm:$0xff] %v375
      %440 = vst [vmem:[%s172 + $0x10] sm:$0xff] %v376
      %441 = vst [vmem:[%s172 + $0x18] sm:$0xff] %v377
      %442 = vst [vmem:[%s172 + $0x20] sm:$0xff] %v378
      %443 = vst [vmem:[%s172 + $0x28] sm:$0xff] %v379
      %444 = vst [vmem:[%s172 + $0x30] sm:$0xff] %v380
      %445 = vst [vmem:[%s172 + $0x38] sm:$0xff] %v381
      %446 = vst [vmem:[%s172 + $0x40] sm:$0xff] %v382
      %447 = vst [vmem:[%s172 + $0x48] sm:$0xff] %v383
      %448 = vst [vmem:[%s172 + $0x50] sm:$0xff] %v384
      %449 = vst [vmem:[%s172 + $0x58] sm:$0xff] %v385
      %450 = vst [vmem:[%s172 + $0x60] sm:$0xff] %v386
      %451 = vst [vmem:[%s172 + $0x68] sm:$0xff] %v387
      %452 = vst [vmem:[%s172 + $0x70] sm:$0xff] %v388
      %453 = vst [vmem:[%s172 + $0x78] sm:$0xff] %v389
      %454 = vst [vmem:[%s172 + $0x80] sm:$0xff] %v390
      %455 = vst [vmem:[%s172 + $0x88] sm:$0xff] %v391
      %456 = vst [vmem:[%s172 + $0x90] sm:$0xff] %v392
      %457 = vst [vmem:[%s172 + $0x98] sm:$0xff] %v393
      %458 = vst [vmem:[%s172 + $0xa0] sm:$0xff] %v394
      %459 = vst [vmem:[%s172 + $0xa8] sm:$0xff] %v395
      %460 = vst [vmem:[%s172 + $0xb0] sm:$0xff] %v396
      %461 = vst [vmem:[%s172 + $0xb8] sm:$0xff] %v397
      %462 = vst [vmem:[%s172 + $0xc0] sm:$0xff] %v398
      %463 = vst [vmem:[%s172 + $0xc8] sm:$0xff] %v399
      %464 = vst [vmem:[%s172 + $0xd0] sm:$0xff] %v400
      %465 = vst [vmem:[%s172 + $0xd8] sm:$0xff] %v401
      %466 = vst [vmem:[%s172 + $0xe0] sm:$0xff] %v402
      %467 = vst [vmem:[%s172 + $0xe8] sm:$0xff] %v403
      %468 = vst [vmem:[%s172 + $0xf0] sm:$0xff] %v404
      %469 = vst [vmem:[%s172 + $0xf8] sm:$0xff] %v405
      %470 = vst [vmem:[%s172 + $0x100] sm:$0xff] %v406
      %471 = vst [vmem:[%s172 + $0x108] sm:$0xff] %v407
      %472 = vst [vmem:[%s172 + $0x110] sm:$0xff] %v408
      %473 = vst [vmem:[%s172 + $0x118] sm:$0xff] %v409
      %474 = vst [vmem:[%s172 + $0x120] sm:$0xff] %v410
      %475 = vst [vmem:[%s172 + $0x128] sm:$0xff] %v411
      %476 = vst [vmem:[%s172 + $0x130] sm:$0xff] %v412
      %477 = vst [vmem:[%s172 + $0x138] sm:$0xff] %v413
      %478 = vst [vmem:[%s172 + $0x140] sm:$0xff] %v414
      %479 = vst [vmem:[%s172 + $0x148] sm:$0xff] %v415
      %480 = vst [vmem:[%s172 + $0x150] sm:$0xff] %v416
      %481 = vst [vmem:[%s172 + $0x158] sm:$0xff] %v417
      %482 = vst [vmem:[%s172 + $0x160] sm:$0xff] %v418
      %483 = vst [vmem:[%s172 + $0x168] sm:$0xff] %v419
      %484 = vst [vmem:[%s172 + $0x170] sm:$0xff] %v420
      %485 = vst [vmem:[%s172 + $0x178] sm:$0xff] %v421
      %486 = vst [vmem:[%s172 + $0x180] sm:$0xff] %v422
      %487 = vst [vmem:[%s172 + $0x188] sm:$0xff] %v423
      %488 = vst [vmem:[%s172 + $0x190] sm:$0xff] %v424
      %489 = vst [vmem:[%s172 + $0x198] sm:$0xff] %v425
      %490 = vst [vmem:[%s172 + $0x1a0] sm:$0xff] %v426
      %491 = vst [vmem:[%s172 + $0x1a8] sm:$0xff] %v427
      %492 = vst [vmem:[%s172 + $0x1b0] sm:$0xff] %v428
      %493 = vst [vmem:[%s172 + $0x1b8] sm:$0xff] %v429
      %494 = vst [vmem:[%s172 + $0x1c0] sm:$0xff] %v430
      %495 = vst [vmem:[%s172 + $0x1c8] sm:$0xff] %v431
      %496 = vst [vmem:[%s172 + $0x1d0] sm:$0xff] %v432
      %497 = vst [vmem:[%s172 + $0x1d8] sm:$0xff] %v433
      %498 = vst [vmem:[%s172 + $0x1e0] sm:$0xff] %v434
      %499 = vst [vmem:[%s172 + $0x1e8] sm:$0xff] %v435
      %500 = vst [vmem:[%s172 + $0x1f0] sm:$0xff] %v436
      %501 = vst [vmem:[%s172 + $0x1f8] sm:$0xff] %v437
      %s502 = smul.u32 64, %s14
      %p503 = scmp.lt.s32.totalorder %s502, 255
      %s504 = scalar_select %p503, %s502, 255
      %s505 = smul.addr %s504, 8
      %s506 = scalar_lea.vmem %s3, %s505
      // Predicated region
      $region33: #{deconv2d_bn_relu.3} parent=31 // pred_check
        %p507 = pneg %p100
      $region34: #{deconv2d_bn_relu.3} parent=31 // pred_check_branch
        %509 = sbr.rel (%p507) target = $region36
      $region35: #{deconv2d_bn_relu.3} parent=31 // pred_region
        %s510 = smul.u32 64, %s14
      $region36: #{deconv2d_bn_relu.3} parent=31 // pred_fallthru
        _
    $region32: #{deconv2d_bn_relu.3} parent=5 // pred_fallthru
      _
    %p511 = scmp.le.s32.totalorder 2, %s9
    // Predicated region
    $region37: #{deconv2d_bn_relu.3} parent=5 // pred_check
      %p512 = pneg %p511
    $region38: #{deconv2d_bn_relu.3} parent=5 // pred_check_branch
      %514 = sbr.rel (%p512) target = $region40
    $region39: #{deconv2d_bn_relu.3} parent=5 // pred_region
      %s515 = ssub.s32 %s9, 2
      // Predicated region
      $region41: #{deconv2d_bn_relu.3} parent=39 // pred_check
        %p516 = pneg %p106
      $region42: #{deconv2d_bn_relu.3} parent=39 // pred_check_branch
        %518 = sbr.rel (%p516) target = $region44
      $region43: #{deconv2d_bn_relu.3} parent=39 // pred_region
        %s519 = smul.u32 64, %s15
        %p520 = scmp.lt.s32.totalorder %s519, 255
        %s521 = scalar_select %p520, %s519, 255
        %s522 = smul.addr %s521, 8
        %s523 = scalar_lea.vmem %s3, %s522
      $region44: #{deconv2d_bn_relu.3} parent=39 // pred_fallthru
        _
    $region40: #{deconv2d_bn_relu.3} parent=5 // pred_fallthru
      _
  $region6: #{deconv2d_bn_relu.3} parent=0 // loop_footer
    %s13 = sadd.s32 1, %s9
  $region7: #{deconv2d_bn_relu.3} parent=0 // loop_footer_branch
    %8 = sbr.rel target = $region3
  $region8: #{deconv2d_bn_relu.3} parent=0 // loop_exit
    _

// kernel: deconv2d_bn_relu.2
$region0: #{deconv2d_bn_relu.2}
  #allocation0 [shape = 'u32[]', space=smem, size = 0x4, offset = 0x4, fixed_abs, tag = 'smem constant byte address 0x4 - core index']
  #allocation1 [shape = 'u32[72,128]{1,0:T(1,128)}', space=vmem, size = 0x9000, scoped, tag = 'internal scratch']
  %s0 = inlined_call_operand.vmem [shape: bf16[2048,36], index: 0, kind: input, shape index: {}]
  %s1 = inlined_call_operand.vmem [shape: bf16[36,128], index: 1, kind: input, shape index: {}]
  %s2 = inlined_call_operand.vmem [shape: f32[2048,128], index: 2, kind: output, shape index: {0}]
  %s3 = inlined_call_operand.vmem [shape: f32[1,128], index: 3, kind: output, shape index: {1}]
  %s4 = inlined_call_operand.vmem [shape: f32[1,128], index: 4, kind: output, shape index: {2}]
  %5 = xla_tuple %s2, %s3, %s4
  %s6 = sld [smem:[#allocation0]]
  $region61: #{deconv2d_bn_relu.2} parent=0
    _
  %s8 = ssub.s32 1, %s6
  %s9 = scalar_select 0, %s8, %s6
  loop: start=0, step=1, limit=6
  $region2: #{deconv2d_bn_relu.2} parent=0 // loop_pre_header
    _
  $region3: #{deconv2d_bn_relu.2} parent=0 // loop_header
    %s11 = sphi 0, %s15
    %p12 = scmp.ge.s32.totalorder %s11, 6
    %s21 = sphi 0, %s23
    %s24 = sphi 0, %s21
    %s25 = sphi 0, %s24
    %s41 = sphi 0, %s25
    %s45 = sphi 0, %s45
    %s47 = sphi 0, %s45
    %s48 = sphi 0, %s47
    %s62 = sphi 0, %s48
    %s68 = sphi 0, %s70
    %s71 = sphi 0, %s68
    %s72 = sphi 0, %s71
    %s88 = sphi 0, %s72
    %s92 = sphi 0, %s92
    %s94 = sphi 0, %s92
    %s95 = sphi 0, %s94
    %s109 = sphi 0, %s95
    %s113 = sphi 0, %s113
    %s115 = sphi 0, %s113
    %s116 = sphi 0, %s115
    %s130 = sphi 0, %s116
  $region4: #{deconv2d_bn_relu.2} parent=0 // loop_header_branch
    %14 = sbr.rel (%p12) target = $region8
  $region5: #{deconv2d_bn_relu.2} parent=0 // loop_body
    %s16 = ssub.s32 %s11, 1
    %s17 = ssub.s32 %s11, 2
    %s18 = sadd.s32 %s11, 1
    %s19 = ssub.s32 %s11, %s18
    %p20 = scmp.eq.s32.totalorder %s19, 0
    %s22 = sadd.s32 %s21, 1
    %s23 = scalar_select %p20, %s21, %s22
    %p26 = pneg %p20
    %p27 = scmp.eq.s32.totalorder %s11, 3
    %p28 = por %p26, %p27
    %p29 = scmp.ne.s32.totalorder %s21, %s24
    %p30 = scmp.eq.s32.totalorder %s11, 0
    %p31 = por %p29, %p30
    %p32 = scmp.ne.s32.totalorder %s21, %s24
    %p33 = scmp.eq.s32.totalorder %s16, 3
    %p34 = por %p32, %p33
    %p35 = scmp.ne.s32.totalorder %s24, %s25
    %p36 = scmp.eq.s32.totalorder %s16, 0
    %p37 = por %p35, %p36
    %p38 = scmp.ne.s32.totalorder %s24, %s25
    %p39 = scmp.eq.s32.totalorder %s17, 3
    %p40 = por %p38, %p39
    %p42 = scmp.ne.s32.totalorder %s25, %s41
    %p43 = scmp.eq.s32.totalorder %s17, 0
    %p44 = por %p42, %p43
    %s46 = sadd.s32 %s45, 1
    %p49 = scmp.eq.s32.totalorder %s11, 3
    %p50 = scmp.ne.s32.totalorder %s45, %s47
    %p51 = scmp.eq.s32.totalorder %s11, 0
    %p52 = por %p50, %p51
    %p53 = scmp.ne.s32.totalorder %s45, %s47
    %p54 = scmp.eq.s32.totalorder %s16, 3
    %p55 = por %p53, %p54
    %p56 = scmp.ne.s32.totalorder %s47, %s48
    %p57 = scmp.eq.s32.totalorder %s16, 0
    %p58 = por %p56, %p57
    %p59 = scmp.ne.s32.totalorder %s47, %s48
    %p60 = scmp.eq.s32.totalorder %s17, 3
    %p61 = por %p59, %p60
    %p63 = scmp.ne.s32.totalorder %s48, %s62
    %p64 = scmp.eq.s32.totalorder %s17, 0
    %p65 = por %p63, %p64
    %s66 = ssub.s32 %s11, %s18
    %p67 = scmp.eq.s32.totalorder %s66, 0
    %s69 = sadd.s32 %s68, 1
    %s70 = scalar_select %p67, %s68, %s69
    %p73 = pneg %p67
    %p74 = scmp.eq.s32.totalorder %s11, 3
    %p75 = por %p73, %p74
    %p76 = scmp.ne.s32.totalorder %s68, %s71
    %p77 = scmp.eq.s32.totalorder %s11, 0
    %p78 = por %p76, %p77
    %p79 = scmp.ne.s32.totalorder %s68, %s71
    %p80 = scmp.eq.s32.totalorder %s16, 3
    %p81 = por %p79, %p80
    %p82 = scmp.ne.s32.totalorder %s71, %s72
    %p83 = scmp.eq.s32.totalorder %s16, 0
    %p84 = por %p82, %p83
    %p85 = scmp.ne.s32.totalorder %s71, %s72
    %p86 = scmp.eq.s32.totalorder %s17, 3
    %p87 = por %p85, %p86
    %p89 = scmp.ne.s32.totalorder %s72, %s88
    %p90 = scmp.eq.s32.totalorder %s17, 0
    %p91 = por %p89, %p90
    %s93 = sadd.s32 %s92, 1
    %p96 = scmp.eq.s32.totalorder %s11, 3
    %p97 = scmp.ne.s32.totalorder %s92, %s94
    %p98 = scmp.eq.s32.totalorder %s11, 0
    %p99 = por %p97, %p98
    %p100 = scmp.ne.s32.totalorder %s92, %s94
    %p101 = scmp.eq.s32.totalorder %s16, 3
    %p102 = por %p100, %p101
    %p103 = scmp.ne.s32.totalorder %s94, %s95
    %p104 = scmp.eq.s32.totalorder %s16, 0
    %p105 = por %p103, %p104
    %p106 = scmp.ne.s32.totalorder %s94, %s95
    %p107 = scmp.eq.s32.totalorder %s17, 3
    %p108 = por %p106, %p107
    %p110 = scmp.ne.s32.totalorder %s95, %s109
    %p111 = scmp.eq.s32.totalorder %s17, 0
    %p112 = por %p110, %p111
    %s114 = sadd.s32 %s113, 1
    %p117 = scmp.eq.s32.totalorder %s11, 3
    %p118 = scmp.ne.s32.totalorder %s113, %s115
    %p119 = scmp.eq.s32.totalorder %s11, 0
    %p120 = por %p118, %p119
    %p121 = scmp.ne.s32.totalorder %s113, %s115
    %p122 = scmp.eq.s32.totalorder %s16, 3
    %p123 = por %p121, %p122
    %p124 = scmp.ne.s32.totalorder %s115, %s116
    %p125 = scmp.eq.s32.totalorder %s16, 0
    %p126 = por %p124, %p125
    %p127 = scmp.ne.s32.totalorder %s115, %s116
    %p128 = scmp.eq.s32.totalorder %s17, 3
    %p129 = por %p127, %p128
    %p131 = scmp.ne.s32.totalorder %s116, %s130
    %p132 = scmp.eq.s32.totalorder %s17, 0
    %p133 = por %p131, %p132
    %p134 = scmp.le.s32.totalorder 1, %s11
    %p135 = scmp.lt.s32.totalorder %s11, 5
    %p136 = pnand %p134, %p135
    %p137 = pneg %p136
    // Predicated region
    $region9: #{deconv2d_bn_relu.2} parent=5 // pred_check
      _
    $region10: #{deconv2d_bn_relu.2} parent=5 // pred_check_branch
      %139 = sbr.rel (%p136) target = $region12
    $region11: #{deconv2d_bn_relu.2} parent=5 // pred_region
      %s140 = ssub.s32 %s11, 1
      // Predicated region
      $region13: #{deconv2d_bn_relu.2} parent=11 // pred_check
        %p141 = pneg %p58
      $region14: #{deconv2d_bn_relu.2} parent=11 // pred_check_branch
        %143 = sbr.rel (%p141) target = $region16
      $region15: #{deconv2d_bn_relu.2} parent=11 // pred_region
        _
      $region16: #{deconv2d_bn_relu.2} parent=11 // pred_fallthru
        _
    $region12: #{deconv2d_bn_relu.2} parent=5 // pred_fallthru
      _
    %p144 = scmp.lt.s32.totalorder %s11, 4
    // Predicated region
    $region17: #{deconv2d_bn_relu.2} parent=5 // pred_check
      %p145 = pneg %p144
    $region18: #{deconv2d_bn_relu.2} parent=5 // pred_check_branch
      %147 = sbr.rel (%p145) target = $region20
    $region19: #{deconv2d_bn_relu.2} parent=5 // pred_region
      // Predicated region
      $region21: #{deconv2d_bn_relu.2} parent=19 // pred_check
        %p148 = pneg %p31
      $region22: #{deconv2d_bn_relu.2} parent=19 // pred_check_branch
        %150 = sbr.rel (%p148) target = $region24
      $region23: #{deconv2d_bn_relu.2} parent=19 // pred_region
        %s151 = smul.u32 64, %s11
        %p152 = scmp.lt.s32.totalorder %s151, 255
        %s153 = scalar_select %p152, %s151, 255
        %s154 = smul.addr %s153, 4
        %s155 = scalar_lea.vmem %s0, %s154
        %s156 = smul.u32 64, %s11
      $region24: #{deconv2d_bn_relu.2} parent=19 // pred_fallthru
        _
    $region20: #{deconv2d_bn_relu.2} parent=5 // pred_fallthru
      _
    %p157 = scmp.le.s32.totalorder 1, %s11
    %p158 = scmp.lt.s32.totalorder %s11, 5
    %p159 = pnand %p157, %p158
    %p160 = pneg %p159
    // Predicated region
    $region25: #{deconv2d_bn_relu.2} parent=5 // pred_check
      _
    $region26: #{deconv2d_bn_relu.2} parent=5 // pred_check_branch
      %162 = sbr.rel (%p159) target = $region28
    $region27: #{deconv2d_bn_relu.2} parent=5 // pred_region
      %s163 = ssub.s32 %s11, 1
      %s164 = smul.u32 64, %s16
      %p165 = scmp.lt.s32.totalorder %s164, 255
      %s166 = scalar_select %p165, %s164, 255
      %s167 = smul.addr %s166, 4
      %s168 = scalar_lea.vmem %s0, %s167
      %p169 = pneg %p37
      %p170 = pneg %p34
      %p171 = pneg %p58
      %p172 = pneg %p55
      %p173 = pneg %p84
      %p174 = pneg %p81
      %s175 = smul.u32 64, %s16
      %p176 = scmp.lt.s32.totalorder %s175, 255
      %s177 = scalar_select %p176, %s175, 255
      %s178 = smul.addr %s177, 8
      %s179 = scalar_lea.vmem %s2, %s178
      %p180 = pneg %p105
      %p181 = pneg %p102
      %p182 = pneg %p126
      %p183 = pneg %p123
      %s184 = smul.u32 64, %s16
      %p185 = scmp.lt.s32.totalorder %s184, 255
      %s186 = scalar_select %p185, %s184, 255
      %s187 = smul.addr %s186, 4
      %s188 = scalar_lea.vmem %s0, %s187
      %s189 = smul.u32 64, %s16
      %s190 = smul.u32 64, %s16
      %p191 = scmp.lt.s32.totalorder %s190, 255
      %s192 = scalar_select %p191, %s190, 255
      %s193 = smul.addr %s192, 8
      %s194 = scalar_lea.vmem %s2, %s193
      %s195 = smul.u32 64, %s16
      %p197 = scmp.eq.s32.totalorder %s16, 0
      // Predicated region
      $region29: #{deconv2d_bn_relu.2} parent=27 // pred_check
        %p198 = pneg %p197
      $region30: #{deconv2d_bn_relu.2} parent=27 // pred_check_branch
        %200 = sbr.rel (%p198) target = $region32
      $region31: #{deconv2d_bn_relu.2} parent=27 // pred_region
        %201 = vst [vmem:[%s3] sm:$0x1] 0.0
        %202 = vst [vmem:[%s4] sm:$0x1] 0.0
      $region32: #{deconv2d_bn_relu.2} parent=27 // pred_fallthru
        _
      %v203 = vld [vmem:[%s188] sm:$0xf]
      %v204 = vld [vmem:[%s188 + $0x4] sm:$0xf]
      %v205 = vld [vmem:[%s188 + $0x8] sm:$0xf]
      %v206 = vld [vmem:[%s188 + $0xc] sm:$0xf]
      %v207 = vld [vmem:[%s188 + $0x10] sm:$0xf]
      %v208 = vld [vmem:[%s188 + $0x14] sm:$0xf]
      %v209 = vld [vmem:[%s188 + $0x18] sm:$0xf]
      %v210 = vld [vmem:[%s188 + $0x1c] sm:$0xf]
      %v211 = vld [vmem:[%s188 + $0x20] sm:$0xf]
      %v212 = vld [vmem:[%s188 + $0x24] sm:$0xf]
      %v213 = vld [vmem:[%s188 + $0x28] sm:$0xf]
      %v214 = vld [vmem:[%s188 + $0x2c] sm:$0xf]
      %v215 = vld [vmem:[%s188 + $0x30] sm:$0xf]
      %v216 = vld [vmem:[%s188 + $0x34] sm:$0xf]
      %v217 = vld [vmem:[%s188 + $0x38] sm:$0xf]
      %v218 = vld [vmem:[%s188 + $0x3c] sm:$0xf]
      %v219 = vld [vmem:[%s188 + $0x40] sm:$0xf]
      %v220 = vld [vmem:[%s188 + $0x44] sm:$0xf]
      %v221 = vld [vmem:[%s188 + $0x48] sm:$0xf]
      %v222 = vld [vmem:[%s188 + $0x4c] sm:$0xf]
      %v223 = vld [vmem:[%s188 + $0x50] sm:$0xf]
      %v224 = vld [vmem:[%s188 + $0x54] sm:$0xf]
      %v225 = vld [vmem:[%s188 + $0x58] sm:$0xf]
      %v226 = vld [vmem:[%s188 + $0x5c] sm:$0xf]
      %v227 = vld [vmem:[%s188 + $0x60] sm:$0xf]
      %v228 = vld [vmem:[%s188 + $0x64] sm:$0xf]
      %v229 = vld [vmem:[%s188 + $0x68] sm:$0xf]
      %v230 = vld [vmem:[%s188 + $0x6c] sm:$0xf]
      %v231 = vld [vmem:[%s188 + $0x70] sm:$0xf]
      %v232 = vld [vmem:[%s188 + $0x74] sm:$0xf]
      %v233 = vld [vmem:[%s188 + $0x78] sm:$0xf]
      %v234 = vld [vmem:[%s188 + $0x7c] sm:$0xf]
      %v235 = vld [vmem:[%s188 + $0x80] sm:$0xf]
      %v236 = vld [vmem:[%s188 + $0x84] sm:$0xf]
      %v237 = vld [vmem:[%s188 + $0x88] sm:$0xf]
      %v238 = vld [vmem:[%s188 + $0x8c] sm:$0xf]
      %v239 = vld [vmem:[%s188 + $0x90] sm:$0xf]
      %v240 = vld [vmem:[%s188 + $0x94] sm:$0xf]
      %v241 = vld [vmem:[%s188 + $0x98] sm:$0xf]
      %v242 = vld [vmem:[%s188 + $0x9c] sm:$0xf]
      %v243 = vld [vmem:[%s188 + $0xa0] sm:$0xf]
      %v244 = vld [vmem:[%s188 + $0xa4] sm:$0xf]
      %v245 = vld [vmem:[%s188 + $0xa8] sm:$0xf]
      %v246 = vld [vmem:[%s188 + $0xac] sm:$0xf]
      %v247 = vld [vmem:[%s188 + $0xb0] sm:$0xf]
      %v248 = vld [vmem:[%s188 + $0xb4] sm:$0xf]
      %v249 = vld [vmem:[%s188 + $0xb8] sm:$0xf]
      %v250 = vld [vmem:[%s188 + $0xbc] sm:$0xf]
      %v251 = vld [vmem:[%s188 + $0xc0] sm:$0xf]
      %v252 = vld [vmem:[%s188 + $0xc4] sm:$0xf]
      %v253 = vld [vmem:[%s188 + $0xc8] sm:$0xf]
      %v254 = vld [vmem:[%s188 + $0xcc] sm:$0xf]
      %v255 = vld [vmem:[%s188 + $0xd0] sm:$0xf]
      %v256 = vld [vmem:[%s188 + $0xd4] sm:$0xf]
      %v257 = vld [vmem:[%s188 + $0xd8] sm:$0xf]
      %v258 = vld [vmem:[%s188 + $0xdc] sm:$0xf]
      %v259 = vld [vmem:[%s188 + $0xe0] sm:$0xf]
      %v260 = vld [vmem:[%s188 + $0xe4] sm:$0xf]
      %v261 = vld [vmem:[%s188 + $0xe8] sm:$0xf]
      %v262 = vld [vmem:[%s188 + $0xec] sm:$0xf]
      %v263 = vld [vmem:[%s188 + $0xf0] sm:$0xf]
      %v264 = vld [vmem:[%s188 + $0xf4] sm:$0xf]
      %v265 = vld [vmem:[%s188 + $0xf8] sm:$0xf]
      %v266 = vld [vmem:[%s188 + $0xfc] sm:$0xf]
      %v267 = vld [vmem:[%s1] sm:$0xf]
      %v268 = vld [vmem:[%s1 + $0x4] sm:$0xf]
      %v269 = vld [vmem:[%s1 + $0x8] sm:$0xf]
      %v270 = vld [vmem:[%s1 + $0xc] sm:$0xf]
      %v271 = vld [vmem:[%s1 + $0x10] sm:$0x3]
      %v336 = vunpack.c.l.b16 %v203
      %v337 = vunpack.c.l.b16 %v204
      %v338 = vunpack.c.l.b16 %v205
      %v339 = vunpack.c.l.b16 %v206
      %v340 = vunpack.c.l.b16 %v207
      %v341 = vunpack.c.l.b16 %v208
      %v342 = vunpack.c.l.b16 %v209
      %v343 = vunpack.c.l.b16 %v210
      %v344 = vunpack.c.l.b16 %v211
      %v345 = vunpack.c.l.b16 %v212
      %v346 = vunpack.c.l.b16 %v213
      %v347 = vunpack.c.l.b16 %v214
      %v348 = vunpack.c.l.b16 %v215
      %v349 = vunpack.c.l.b16 %v216
      %v350 = vunpack.c.l.b16 %v217
      %v351 = vunpack.c.l.b16 %v218
      %v352 = vunpack.c.l.b16 %v219
      %v353 = vunpack.c.l.b16 %v220
      %v354 = vunpack.c.l.b16 %v221
      %v355 = vunpack.c.l.b16 %v222
      %v356 = vunpack.c.l.b16 %v223
      %v357 = vunpack.c.l.b16 %v224
      %v358 = vunpack.c.l.b16 %v225
      %v359 = vunpack.c.l.b16 %v226
      %v360 = vunpack.c.l.b16 %v227
      %v361 = vunpack.c.l.b16 %v228
      %v362 = vunpack.c.l.b16 %v229
      %v363 = vunpack.c.l.b16 %v230
      %v364 = vunpack.c.l.b16 %v231
      %v365 = vunpack.c.l.b16 %v232
      %v366 = vunpack.c.l.b16 %v233
      %v367 = vunpack.c.l.b16 %v234
      %v368 = vunpack.c.l.b16 %v235
      %v369 = vunpack.c.l.b16 %v236
      %v370 = vunpack.c.l.b16 %v237
      %v371 = vunpack.c.l.b16 %v238
      %v372 = vunpack.c.l.b16 %v239
      %v373 = vunpack.c.l.b16 %v240
      %v374 = vunpack.c.l.b16 %v241
      %v375 = vunpack.c.l.b16 %v242
      %v376 = vunpack.c.l.b16 %v243
      %v377 = vunpack.c.l.b16 %v244
      %v378 = vunpack.c.l.b16 %v245
      %v379 = vunpack.c.l.b16 %v246
      %v380 = vunpack.c.l.b16 %v247
      %v381 = vunpack.c.l.b16 %v248
      %v382 = vunpack.c.l.b16 %v249
      %v383 = vunpack.c.l.b16 %v250
      %v384 = vunpack.c.l.b16 %v251
      %v385 = vunpack.c.l.b16 %v252
      %v386 = vunpack.c.l.b16 %v253
      %v387 = vunpack.c.l.b16 %v254
      %v388 = vunpack.c.l.b16 %v255
      %v389 = vunpack.c.l.b16 %v256
      %v390 = vunpack.c.l.b16 %v257
      %v391 = vunpack.c.l.b16 %v258
      %v392 = vunpack.c.l.b16 %v259
      %v393 = vunpack.c.l.b16 %v260
      %v394 = vunpack.c.l.b16 %v261
      %v395 = vunpack.c.l.b16 %v262
      %v396 = vunpack.c.l.b16 %v263
      %v397 = vunpack.c.l.b16 %v264
      %v398 = vunpack.c.l.b16 %v265
      %v399 = vunpack.c.l.b16 %v266
      %v400 = vpack.c.b16 %v337, %v336
      %v401 = vpack.c.b16 %v339, %v338
      %v402 = vpack.c.b16 %v341, %v340
      %v403 = vpack.c.b16 %v343, %v342
      %v404 = vpack.c.b16 %v345, %v344
      %v405 = vpack.c.b16 %v347, %v346
      %v406 = vpack.c.b16 %v349, %v348
      %v407 = vpack.c.b16 %v351, %v350
      %v408 = vpack.c.b16 %v353, %v352
      %v409 = vpack.c.b16 %v355, %v354
      %v410 = vpack.c.b16 %v357, %v356
      %v411 = vpack.c.b16 %v359, %v358
      %v412 = vpack.c.b16 %v361, %v360
      %v413 = vpack.c.b16 %v363, %v362
      %v414 = vpack.c.b16 %v365, %v364
      %v415 = vpack.c.b16 %v367, %v366
      %v416 = vpack.c.b16 %v369, %v368
      %v417 = vpack.c.b16 %v371, %v370
      %v418 = vpack.c.b16 %v373, %v372
      %v419 = vpack.c.b16 %v375, %v374
      %v420 = vpack.c.b16 %v377, %v376
      %v421 = vpack.c.b16 %v379, %v378
      %v422 = vpack.c.b16 %v381, %v380
      %v423 = vpack.c.b16 %v383, %v382
      %v424 = vpack.c.b16 %v385, %v384
      %v425 = vpack.c.b16 %v387, %v386
      %v426 = vpack.c.b16 %v389, %v388
      %v427 = vpack.c.b16 %v391, %v390
      %v428 = vpack.c.b16 %v393, %v392
      %v429 = vpack.c.b16 %v395, %v394
      %v430 = vpack.c.b16 %v397, %v396
      %v431 = vpack.c.b16 %v399, %v398
      %v437 = vunpack.c.l.b16 %v267
      %v438 = vunpack.c.l.b16 %v268
      %v439 = vunpack.c.l.b16 %v269
      %v440 = vunpack.c.l.b16 %v270
      %v441 = vunpack.c.l.b16 %v271
      %v442 = vpack.c.b16 %v438, %v437
      %v443 = vpack.c.b16 %v440, %v439
      %v444 = vpack.c.b16 %v441, %v441
      %vm447 = vcmask 293888
      %v449 = vsel %vm447, %v400, 0
      %v452 = vsel %vm447, %v401, 0
      %v455 = vsel %vm447, %v402, 0
      %v458 = vsel %vm447, %v403, 0
      %v461 = vsel %vm447, %v404, 0
      %v464 = vsel %vm447, %v405, 0
      %v467 = vsel %vm447, %v406, 0
      %v470 = vsel %vm447, %v407, 0
      %v473 = vsel %vm447, %v408, 0
      %v476 = vsel %vm447, %v409, 0
      %v479 = vsel %vm447, %v410, 0
      %v482 = vsel %vm447, %v411, 0
      %v485 = vsel %vm447, %v412, 0
      %v488 = vsel %vm447, %v413, 0
      %v491 = vsel %vm447, %v414, 0
      %v494 = vsel %vm447, %v415, 0
      %v497 = vsel %vm447, %v416, 0
      %v500 = vsel %vm447, %v417, 0
      %v503 = vsel %vm447, %v418, 0
      %v506 = vsel %vm447, %v419, 0
      %v509 = vsel %vm447, %v420, 0
      %v512 = vsel %vm447, %v421, 0
      %v515 = vsel %vm447, %v422, 0
      %v518 = vsel %vm447, %v423, 0
      %v521 = vsel %vm447, %v424, 0
      %v524 = vsel %vm447, %v425, 0
      %v527 = vsel %vm447, %v426, 0
      %v530 = vsel %vm447, %v427, 0
      %v533 = vsel %vm447, %v428, 0
      %v536 = vsel %vm447, %v429, 0
      %v539 = vsel %vm447, %v430, 0
      %v542 = vsel %vm447, %v431, 0
      %vm544 = vcmask 1041408
      %v546 = vsel %vm544, %v444, 0
      %548 = vmatpush.bf16.msra.mxu0 0
      %549 = vmatpush.bf16.msra.mxu0 0
      %550 = vmatpush.bf16.msra.mxu0 0
      %551 = vmatpush.bf16.msra.mxu0 0
      %552 = vmatpush.bf16.msra.mxu0 0
      %553 = vmatpush.bf16.msra.mxu0 %v546
      %554 = vmatpush.bf16.msra.mxu0 %v443
      %555 = vmatpush.bf16.msra.mxu0 %v442
      %556 = vmatmul.bf16.gmra.mxu0 %v449
      %v557 = vpop.f32.mrf.mxu0
      %v558 = vadd.f32 0.0, %v557
      %v559 = vpop.f32.mrf.mxu0
      %v560 = vadd.f32 0.0, %v559
      %561 = vmatmul.bf16.gmra.mxu0 %v452
      %v562 = vpop.f32.mrf.mxu0
      %v563 = vadd.f32 0.0, %v562
      %v564 = vpop.f32.mrf.mxu0
      %v565 = vadd.f32 0.0, %v564
      %566 = vmatmul.bf16.gmra.mxu0 %v455
      %v567 = vpop.f32.mrf.mxu0
      %v568 = vadd.f32 0.0, %v567
      %v569 = vpop.f32.mrf.mxu0
      %v570 = vadd.f32 0.0, %v569
      %571 = vmatmul.bf16.gmra.mxu0 %v458
      %v572 = vpop.f32.mrf.mxu0
      %v573 = vadd.f32 0.0, %v572
      %v574 = vpop.f32.mrf.mxu0
      %v575 = vadd.f32 0.0, %v574
      %576 = vmatmul.bf16.gmra.mxu0 %v461
      %v577 = vpop.f32.mrf.mxu0
      %v578 = vadd.f32 0.0, %v577
      %v579 = vpop.f32.mrf.mxu0
      %v580 = vadd.f32 0.0, %v579
      %581 = vmatmul.bf16.gmra.mxu0 %v464
      %v582 = vpop.f32.mrf.mxu0
      %v583 = vadd.f32 0.0, %v582
      %v584 = vpop.f32.mrf.mxu0
      %v585 = vadd.f32 0.0, %v584
      %586 = vmatmul.bf16.gmra.mxu0 %v467
      %v587 = vpop.f32.mrf.mxu0
      %v588 = vadd.f32 0.0, %v587
      %v589 = vpop.f32.mrf.mxu0
      %v590 = vadd.f32 0.0, %v589
      %591 = vmatmul.bf16.gmra.mxu0 %v470
      %v592 = vpop.f32.mrf.mxu0
      %v593 = vadd.f32 0.0, %v592
      %v594 = vpop.f32.mrf.mxu0
      %v595 = vadd.f32 0.0, %v594
      %596 = vmatmul.bf16.gmra.mxu0 %v473
      %v597 = vpop.f32.mrf.mxu0
      %v598 = vadd.f32 0.0, %v597
      %v599 = vpop.f32.mrf.mxu0
      %v600 = vadd.f32 0.0, %v599
      %601 = vmatmul.bf16.gmra.mxu0 %v476
      %v602 = vpop.f32.mrf.mxu0
      %v603 = vadd.f32 0.0, %v602
      %v604 = vpop.f32.mrf.mxu0
      %v605 = vadd.f32 0.0, %v604
      %606 = vmatmul.bf16.gmra.mxu0 %v479
      %v607 = vpop.f32.mrf.mxu0
      %v608 = vadd.f32 0.0, %v607
      %v609 = vpop.f32.mrf.mxu0
      %v610 = vadd.f32 0.0, %v609
      %611 = vmatmul.bf16.gmra.mxu0 %v482
      %v612 = vpop.f32.mrf.mxu0
      %v613 = vadd.f32 0.0, %v612
      %v614 = vpop.f32.mrf.mxu0
      %v615 = vadd.f32 0.0, %v614
      %616 = vmatmul.bf16.gmra.mxu0 %v485
      %v617 = vpop.f32.mrf.mxu0
      %v618 = vadd.f32 0.0, %v617
      %v619 = vpop.f32.mrf.mxu0
      %v620 = vadd.f32 0.0, %v619
      %621 = vmatmul.bf16.gmra.mxu0 %v488
      %v622 = vpop.f32.mrf.mxu0
      %v623 = vadd.f32 0.0, %v622
      %v624 = vpop.f32.mrf.mxu0
      %v625 = vadd.f32 0.0, %v624
      %626 = vmatmul.bf16.gmra.mxu0 %v491
      %v627 = vpop.f32.mrf.mxu0
      %v628 = vadd.f32 0.0, %v627
      %v629 = vpop.f32.mrf.mxu0
      %v630 = vadd.f32 0.0, %v629
      %631 = vmatmul.bf16.gmra.mxu0 %v494
      %v632 = vpop.f32.mrf.mxu0
      %v633 = vadd.f32 0.0, %v632
      %v634 = vpop.f32.mrf.mxu0
      %v635 = vadd.f32 0.0, %v634
      %636 = vmatmul.bf16.gmra.mxu0 %v497
      %v637 = vpop.f32.mrf.mxu0
      %v638 = vadd.f32 0.0, %v637
      %v639 = vpop.f32.mrf.mxu0
      %v640 = vadd.f32 0.0, %v639
      %641 = vmatmul.bf16.gmra.mxu0 %v500
      %v642 = vpop.f32.mrf.mxu0
      %v643 = vadd.f32 0.0, %v642
      %v644 = vpop.f32.mrf.mxu0
      %v645 = vadd.f32 0.0, %v644
      %646 = vmatmul.bf16.gmra.mxu0 %v503
      %v647 = vpop.f32.mrf.mxu0
      %v648 = vadd.f32 0.0, %v647
      %v649 = vpop.f32.mrf.mxu0
      %v650 = vadd.f32 0.0, %v649
      %651 = vmatmul.bf16.gmra.mxu0 %v506
      %v652 = vpop.f32.mrf.mxu0
      %v653 = vadd.f32 0.0, %v652
      %v654 = vpop.f32.mrf.mxu0
      %v655 = vadd.f32 0.0, %v654
      %656 = vmatmul.bf16.gmra.mxu0 %v509
      %v657 = vpop.f32.mrf.mxu0
      %v658 = vadd.f32 0.0, %v657
      %v659 = vpop.f32.mrf.mxu0
      %v660 = vadd.f32 0.0, %v659
      %661 = vmatmul.bf16.gmra.mxu0 %v512
      %v662 = vpop.f32.mrf.mxu0
      %v663 = vadd.f32 0.0, %v662
      %v664 = vpop.f32.mrf.mxu0
      %v665 = vadd.f32 0.0, %v664
      %666 = vmatmul.bf16.gmra.mxu0 %v515
      %v667 = vpop.f32.mrf.mxu0
      %v668 = vadd.f32 0.0, %v667
      %v669 = vpop.f32.mrf.mxu0
      %v670 = vadd.f32 0.0, %v669
      %671 = vmatmul.bf16.gmra.mxu0 %v518
      %v672 = vpop.f32.mrf.mxu0
      %v673 = vadd.f32 0.0, %v672
      %v674 = vpop.f32.mrf.mxu0
      %v675 = vadd.f32 0.0, %v674
      %676 = vmatmul.bf16.gmra.mxu0 %v521
      %v677 = vpop.f32.mrf.mxu0
      %v678 = vadd.f32 0.0, %v677
      %v679 = vpop.f32.mrf.mxu0
      %v680 = vadd.f32 0.0, %v679
      %681 = vmatmul.bf16.gmra.mxu0 %v524
      %v682 = vpop.f32.mrf.mxu0
      %v683 = vadd.f32 0.0, %v682
      %v684 = vpop.f32.mrf.mxu0
      %v685 = vadd.f32 0.0, %v684
      %686 = vmatmul.bf16.gmra.mxu0 %v527
      %v687 = vpop.f32.mrf.mxu0
      %v688 = vadd.f32 0.0, %v687
      %v689 = vpop.f32.mrf.mxu0
      %v690 = vadd.f32 0.0, %v689
      %691 = vmatmul.bf16.gmra.mxu0 %v530
      %v692 = vpop.f32.mrf.mxu0
      %v693 = vadd.f32 0.0, %v692
      %v694 = vpop.f32.mrf.mxu0
      %v695 = vadd.f32 0.0, %v694
      %696 = vmatmul.bf16.gmra.mxu0 %v533
      %v697 = vpop.f32.mrf.mxu0
      %v698 = vadd.f32 0.0, %v697
      %v699 = vpop.f32.mrf.mxu0
      %v700 = vadd.f32 0.0, %v699
      %701 = vmatmul.bf16.gmra.mxu0 %v536
      %v702 = vpop.f32.mrf.mxu0
      %v703 = vadd.f32 0.0, %v702
      %v704 = vpop.f32.mrf.mxu0
      %v705 = vadd.f32 0.0, %v704
      %706 = vmatmul.bf16.gmra.mxu0 %v539
      %v707 = vpop.f32.mrf.mxu0
      %v708 = vadd.f32 0.0, %v707
      %v709 = vpop.f32.mrf.mxu0
      %v710 = vadd.f32 0.0, %v709
      %711 = vmatmul.bf16.gmra.mxu0 %v542
      %v712 = vpop.f32.mrf.mxu0
      %v713 = vadd.f32 0.0, %v712
      %v714 = vpop.f32.mrf.mxu0
      %v715 = vadd.f32 0.0, %v714
      %716 = vdwg.mxu0
      %717 = vst [vmem:[%s194] sm:$0xff] %v558
      %718 = vst [vmem:[%s194 + $0x8] sm:$0xff] %v560
      %719 = vst [vmem:[%s194 + $0x10] sm:$0xff] %v563
      %720 = vst [vmem:[%s194 + $0x18] sm:$0xff] %v565
      %721 = vst [vmem:[%s194 + $0x20] sm:$0xff] %v568
      %722 = vst [vmem:[%s194 + $0x28] sm:$0xff] %v570
      %723 = vst [vmem:[%s194 + $0x30] sm:$0xff] %v573
      %724 = vst [vmem:[%s194 + $0x38] sm:$0xff] %v575
      %725 = vst [vmem:[%s194 + $0x40] sm:$0xff] %v578
      %726 = vst [vmem:[%s194 + $0x48] sm:$0xff] %v580
      %727 = vst [vmem:[%s194 + $0x50] sm:$0xff] %v583
      %728 = vst [vmem:[%s194 + $0x58] sm:$0xff] %v585
      %729 = vst [vmem:[%s194 + $0x60] sm:$0xff] %v588
      %730 = vst [vmem:[%s194 + $0x68] sm:$0xff] %v590
      %731 = vst [vmem:[%s194 + $0x70] sm:$0xff] %v593
      %732 = vst [vmem:[%s194 + $0x78] sm:$0xff] %v595
      %733 = vst [vmem:[%s194 + $0x80] sm:$0xff] %v598
      %734 = vst [vmem:[%s194 + $0x88] sm:$0xff] %v600
      %735 = vst [vmem:[%s194 + $0x90] sm:$0xff] %v603
      %736 = vst [vmem:[%s194 + $0x98] sm:$0xff] %v605
      %737 = vst [vmem:[%s194 + $0xa0] sm:$0xff] %v608
      %738 = vst [vmem:[%s194 + $0xa8] sm:$0xff] %v610
      %739 = vst [vmem:[%s194 + $0xb0] sm:$0xff] %v613
      %740 = vst [vmem:[%s194 + $0xb8] sm:$0xff] %v615
      %741 = vst [vmem:[%s194 + $0xc0] sm:$0xff] %v618
      %742 = vst [vmem:[%s194 + $0xc8] sm:$0xff] %v620
      %743 = vst [vmem:[%s194 + $0xd0] sm:$0xff] %v623
      %744 = vst [vmem:[%s194 + $0xd8] sm:$0xff] %v625
      %745 = vst [vmem:[%s194 + $0xe0] sm:$0xff] %v628
      %746 = vst [vmem:[%s194 + $0xe8] sm:$0xff] %v630
      %747 = vst [vmem:[%s194 + $0xf0] sm:$0xff] %v633
      %748 = vst [vmem:[%s194 + $0xf8] sm:$0xff] %v635
      %749 = vst [vmem:[%s194 + $0x100] sm:$0xff] %v638
      %750 = vst [vmem:[%s194 + $0x108] sm:$0xff] %v640
      %751 = vst [vmem:[%s194 + $0x110] sm:$0xff] %v643
      %752 = vst [vmem:[%s194 + $0x118] sm:$0xff] %v645
      %753 = vst [vmem:[%s194 + $0x120] sm:$0xff] %v648
      %754 = vst [vmem:[%s194 + $0x128] sm:$0xff] %v650
      %755 = vst [vmem:[%s194 + $0x130] sm:$0xff] %v653
      %756 = vst [vmem:[%s194 + $0x138] sm:$0xff] %v655
      %757 = vst [vmem:[%s194 + $0x140] sm:$0xff] %v658
      %758 = vst [vmem:[%s194 + $0x148] sm:$0xff] %v660
      %759 = vst [vmem:[%s194 + $0x150] sm:$0xff] %v663
      %760 = vst [vmem:[%s194 + $0x158] sm:$0xff] %v665
      %761 = vst [vmem:[%s194 + $0x160] sm:$0xff] %v668
      %762 = vst [vmem:[%s194 + $0x168] sm:$0xff] %v670
      %763 = vst [vmem:[%s194 + $0x170] sm:$0xff] %v673
      %764 = vst [vmem:[%s194 + $0x178] sm:$0xff] %v675
      %765 = vst [vmem:[%s194 + $0x180] sm:$0xff] %v678
      %766 = vst [vmem:[%s194 + $0x188] sm:$0xff] %v680
      %767 = vst [vmem:[%s194 + $0x190] sm:$0xff] %v683
      %768 = vst [vmem:[%s194 + $0x198] sm:$0xff] %v685
      %769 = vst [vmem:[%s194 + $0x1a0] sm:$0xff] %v688
      %770 = vst [vmem:[%s194 + $0x1a8] sm:$0xff] %v690
      %771 = vst [vmem:[%s194 + $0x1b0] sm:$0xff] %v693
      %772 = vst [vmem:[%s194 + $0x1b8] sm:$0xff] %v695
      %773 = vst [vmem:[%s194 + $0x1c0] sm:$0xff] %v698
      %774 = vst [vmem:[%s194 + $0x1c8] sm:$0xff] %v700
      %775 = vst [vmem:[%s194 + $0x1d0] sm:$0xff] %v703
      %776 = vst [vmem:[%s194 + $0x1d8] sm:$0xff] %v705
      %777 = vst [vmem:[%s194 + $0x1e0] sm:$0xff] %v708
      %778 = vst [vmem:[%s194 + $0x1e8] sm:$0xff] %v710
      %779 = vst [vmem:[%s194 + $0x1f0] sm:$0xff] %v713
      %780 = vst [vmem:[%s194 + $0x1f8] sm:$0xff] %v715
      %v781 = vld [vmem:[%s3] sm:$0x1]
      %v782 = vadd.f32 %v558, %v560
      %v783 = vadd.f32 %v782, %v563
      %v784 = vadd.f32 %v783, %v565
      %v785 = vadd.f32 %v784, %v568
      %v786 = vadd.f32 %v785, %v570
      %v787 = vadd.f32 %v786, %v573
      %v788 = vadd.f32 %v787, %v575
      %v789 = vadd.f32 %v788, %v578
      %v790 = vadd.f32 %v789, %v580
      %v791 = vadd.f32 %v790, %v583
      %v792 = vadd.f32 %v791, %v585
      %v793 = vadd.f32 %v792, %v588
      %v794 = vadd.f32 %v793, %v590
      %v795 = vadd.f32 %v794, %v593
      %v796 = vadd.f32 %v795, %v595
      %v797 = vadd.f32 %v796, %v598
      %v798 = vadd.f32 %v797, %v600
      %v799 = vadd.f32 %v798, %v603
      %v800 = vadd.f32 %v799, %v605
      %v801 = vadd.f32 %v800, %v608
      %v802 = vadd.f32 %v801, %v610
      %v803 = vadd.f32 %v802, %v613
      %v804 = vadd.f32 %v803, %v615
      %v805 = vadd.f32 %v804, %v618
      %v806 = vadd.f32 %v805, %v620
      %v807 = vadd.f32 %v806, %v623
      %v808 = vadd.f32 %v807, %v625
      %v809 = vadd.f32 %v808, %v628
      %v810 = vadd.f32 %v809, %v630
      %v811 = vadd.f32 %v810, %v633
      %v812 = vadd.f32 %v811, %v635
      %v813 = vadd.f32 %v812, %v638
      %v814 = vadd.f32 %v813, %v640
      %v815 = vadd.f32 %v814, %v643
      %v816 = vadd.f32 %v815, %v645
      %v817 = vadd.f32 %v816, %v648
      %v818 = vadd.f32 %v817, %v650
      %v819 = vadd.f32 %v818, %v653
      %v820 = vadd.f32 %v819, %v655
      %v821 = vadd.f32 %v820, %v658
      %v822 = vadd.f32 %v821, %v660
      %v823 = vadd.f32 %v822, %v663
      %v824 = vadd.f32 %v823, %v665
      %v825 = vadd.f32 %v824, %v668
      %v826 = vadd.f32 %v825, %v670
      %v827 = vadd.f32 %v826, %v673
      %v828 = vadd.f32 %v827, %v675
      %v829 = vadd.f32 %v828, %v678
      %v830 = vadd.f32 %v829, %v680
      %v831 = vadd.f32 %v830, %v683
      %v832 = vadd.f32 %v831, %v685
      %v833 = vadd.f32 %v832, %v688
      %v834 = vadd.f32 %v833, %v690
      %v835 = vadd.f32 %v834, %v693
      %v836 = vadd.f32 %v835, %v695
      %v837 = vadd.f32 %v836, %v698
      %v838 = vadd.f32 %v837, %v700
      %v839 = vadd.f32 %v838, %v703
      %v840 = vadd.f32 %v839, %v705
      %v841 = vadd.f32 %v840, %v708
      %v842 = vadd.f32 %v841, %v710
      %v843 = vadd.f32 %v842, %v713
      %v844 = vadd.f32 %v843, %v715
      %v845 = vrot.slane %v844, 4
      %v846 = vadd.f32 %v844, %v845
      %v847 = vrot.slane %v846, 2
      %v848 = vadd.f32 %v846, %v847
      %v849 = vrot.slane %v848, 1
      %v850 = vadd.f32 %v848, %v849
      %v851 = vadd.f32 %v781, %v850
      %852 = vst [vmem:[%s3] sm:$0x1] %v851
      %v853 = vld [vmem:[%s4] sm:$0x1]
      %v854 = vmul.f32 %v558, %v558
      %v855 = vmul.f32 %v560, %v560
      %v856 = vmul.f32 %v563, %v563
      %v857 = vmul.f32 %v565, %v565
      %v858 = vmul.f32 %v568, %v568
      %v859 = vmul.f32 %v570, %v570
      %v860 = vmul.f32 %v573, %v573
      %v861 = vmul.f32 %v575, %v575
      %v862 = vmul.f32 %v578, %v578
      %v863 = vmul.f32 %v580, %v580
      %v864 = vmul.f32 %v583, %v583
      %v865 = vmul.f32 %v585, %v585
      %v866 = vmul.f32 %v588, %v588
      %v867 = vmul.f32 %v590, %v590
      %v868 = vmul.f32 %v593, %v593
      %v869 = vmul.f32 %v595, %v595
      %v870 = vmul.f32 %v598, %v598
      %v871 = vmul.f32 %v600, %v600
      %v872 = vmul.f32 %v603, %v603
      %v873 = vmul.f32 %v605, %v605
      %v874 = vmul.f32 %v608, %v608
      %v875 = vmul.f32 %v610, %v610
      %v876 = vmul.f32 %v613, %v613
      %v877 = vmul.f32 %v615, %v615
      %v878 = vmul.f32 %v618, %v618
      %v879 = vmul.f32 %v620, %v620
      %v880 = vmul.f32 %v623, %v623
      %v881 = vmul.f32 %v625, %v625
      %v882 = vmul.f32 %v628, %v628
      %v883 = vmul.f32 %v630, %v630
      %v884 = vmul.f32 %v633, %v633
      %v885 = vmul.f32 %v635, %v635
      %v886 = vmul.f32 %v638, %v638
      %v887 = vmul.f32 %v640, %v640
      %v888 = vmul.f32 %v643, %v643
      %v889 = vmul.f32 %v645, %v645
      %v890 = vmul.f32 %v648, %v648
      %v891 = vmul.f32 %v650, %v650
      %v892 = vmul.f32 %v653, %v653
      %v893 = vmul.f32 %v655, %v655
      %v894 = vmul.f32 %v658, %v658
      %v895 = vmul.f32 %v660, %v660
      %v896 = vmul.f32 %v663, %v663
      %v897 = vmul.f32 %v665, %v665
      %v898 = vmul.f32 %v668, %v668
      %v899 = vmul.f32 %v670, %v670
      %v900 = vmul.f32 %v673, %v673
      %v901 = vmul.f32 %v675, %v675
      %v902 = vmul.f32 %v678, %v678
      %v903 = vmul.f32 %v680, %v680
      %v904 = vmul.f32 %v683, %v683
      %v905 = vmul.f32 %v685, %v685
      %v906 = vmul.f32 %v688, %v688
      %v907 = vmul.f32 %v690, %v690
      %v908 = vmul.f32 %v693, %v693
      %v909 = vmul.f32 %v695, %v695
      %v910 = vmul.f32 %v698, %v698
      %v911 = vmul.f32 %v700, %v700
      %v912 = vmul.f32 %v703, %v703
      %v913 = vmul.f32 %v705, %v705
      %v914 = vmul.f32 %v708, %v708
      %v915 = vmul.f32 %v710, %v710
      %v916 = vmul.f32 %v713, %v713
      %v917 = vmul.f32 %v715, %v715
      %v918 = vadd.f32 %v854, %v855
      %v919 = vadd.f32 %v918, %v856
      %v920 = vadd.f32 %v919, %v857
      %v921 = vadd.f32 %v920, %v858
      %v922 = vadd.f32 %v921, %v859
      %v923 = vadd.f32 %v922, %v860
      %v924 = vadd.f32 %v923, %v861
      %v925 = vadd.f32 %v924, %v862
      %v926 = vadd.f32 %v925, %v863
      %v927 = vadd.f32 %v926, %v864
      %v928 = vadd.f32 %v927, %v865
      %v929 = vadd.f32 %v928, %v866
      %v930 = vadd.f32 %v929, %v867
      %v931 = vadd.f32 %v930, %v868
      %v932 = vadd.f32 %v931, %v869
      %v933 = vadd.f32 %v932, %v870
      %v934 = vadd.f32 %v933, %v871
      %v935 = vadd.f32 %v934, %v872
      %v936 = vadd.f32 %v935, %v873
      %v937 = vadd.f32 %v936, %v874
      %v938 = vadd.f32 %v937, %v875
      %v939 = vadd.f32 %v938, %v876
      %v940 = vadd.f32 %v939, %v877
      %v941 = vadd.f32 %v940, %v878
      %v942 = vadd.f32 %v941, %v879
      %v943 = vadd.f32 %v942, %v880
      %v944 = vadd.f32 %v943, %v881
      %v945 = vadd.f32 %v944, %v882
      %v946 = vadd.f32 %v945, %v883
      %v947 = vadd.f32 %v946, %v884
      %v948 = vadd.f32 %v947, %v885
      %v949 = vadd.f32 %v948, %v886
      %v950 = vadd.f32 %v949, %v887
      %v951 = vadd.f32 %v950, %v888
      %v952 = vadd.f32 %v951, %v889
      %v953 = vadd.f32 %v952, %v890
      %v954 = vadd.f32 %v953, %v891
      %v955 = vadd.f32 %v954, %v892
      %v956 = vadd.f32 %v955, %v893
      %v957 = vadd.f32 %v956, %v894
      %v958 = vadd.f32 %v957, %v895
      %v959 = vadd.f32 %v958, %v896
      %v960 = vadd.f32 %v959, %v897
      %v961 = vadd.f32 %v960, %v898
      %v962 = vadd.f32 %v961, %v899
      %v963 = vadd.f32 %v962, %v900
      %v964 = vadd.f32 %v963, %v901
      %v965 = vadd.f32 %v964, %v902
      %v966 = vadd.f32 %v965, %v903
      %v967 = vadd.f32 %v966, %v904
      %v968 = vadd.f32 %v967, %v905
      %v969 = vadd.f32 %v968, %v906
      %v970 = vadd.f32 %v969, %v907
      %v971 = vadd.f32 %v970, %v908
      %v972 = vadd.f32 %v971, %v909
      %v973 = vadd.f32 %v972, %v910
      %v974 = vadd.f32 %v973, %v911
      %v975 = vadd.f32 %v974, %v912
      %v976 = vadd.f32 %v975, %v913
      %v977 = vadd.f32 %v976, %v914
      %v978 = vadd.f32 %v977, %v915
      %v979 = vadd.f32 %v978, %v916
      %v980 = vadd.f32 %v979, %v917
      %v981 = vrot.slane %v980, 4
      %v982 = vadd.f32 %v980, %v981
      %v983 = vrot.slane %v982, 2
      %v984 = vadd.f32 %v982, %v983
      %v985 = vrot.slane %v984, 1
      %v986 = vadd.f32 %v984, %v985
      %v987 = vadd.f32 %v853, %v986
      %988 = vst [vmem:[%s4] sm:$0x1] %v987
      %s989 = smul.u32 64, %s16
      %p990 = scmp.lt.s32.totalorder %s989, 255
      %s991 = scalar_select %p990, %s989, 255
      %s992 = smul.addr %s991, 8
      %s993 = scalar_lea.vmem %s2, %s992
      // Predicated region
      $region33: #{deconv2d_bn_relu.2} parent=27 // pred_check
        %p994 = pneg %p81
      $region34: #{deconv2d_bn_relu.2} parent=27 // pred_check_branch
        %996 = sbr.rel (%p994) target = $region36
      $region35: #{deconv2d_bn_relu.2} parent=27 // pred_region
        %s997 = smul.u32 64, %s16
      $region36: #{deconv2d_bn_relu.2} parent=27 // pred_fallthru
        _
      // Predicated region
      $region37: #{deconv2d_bn_relu.2} parent=27 // pred_check
        %p998 = pneg %p102
      $region38: #{deconv2d_bn_relu.2} parent=27 // pred_check_branch
        %1000 = sbr.rel (%p998) target = $region40
      $region39: #{deconv2d_bn_relu.2} parent=27 // pred_region
        _
      $region40: #{deconv2d_bn_relu.2} parent=27 // pred_fallthru
        _
      // Predicated region
      $region41: #{deconv2d_bn_relu.2} parent=27 // pred_check
        %p1001 = pneg %p123
      $region42: #{deconv2d_bn_relu.2} parent=27 // pred_check_branch
        %1003 = sbr.rel (%p1001) target = $region44
      $region43: #{deconv2d_bn_relu.2} parent=27 // pred_region
        _
      $region44: #{deconv2d_bn_relu.2} parent=27 // pred_fallthru
        _
      // Predicated region
      $region45: #{deconv2d_bn_relu.2} parent=27 // pred_check
        %p1004 = pneg %p102
      $region46: #{deconv2d_bn_relu.2} parent=27 // pred_check_branch
        %1006 = sbr.rel (%p1004) target = $region48
      $region47: #{deconv2d_bn_relu.2} parent=27 // pred_region
        _
      $region48: #{deconv2d_bn_relu.2} parent=27 // pred_fallthru
        _
      // Predicated region
      $region49: #{deconv2d_bn_relu.2} parent=27 // pred_check
        %p1007 = pneg %p123
      $region50: #{deconv2d_bn_relu.2} parent=27 // pred_check_branch
        %1009 = sbr.rel (%p1007) target = $region52
      $region51: #{deconv2d_bn_relu.2} parent=27 // pred_region
        _
      $region52: #{deconv2d_bn_relu.2} parent=27 // pred_fallthru
        _
    $region28: #{deconv2d_bn_relu.2} parent=5 // pred_fallthru
      _
    %p1010 = scmp.le.s32.totalorder 2, %s11
    // Predicated region
    $region53: #{deconv2d_bn_relu.2} parent=5 // pred_check
      %p1011 = pneg %p1010
    $region54: #{deconv2d_bn_relu.2} parent=5 // pred_check_branch
      %1013 = sbr.rel (%p1011) target = $region56
    $region55: #{deconv2d_bn_relu.2} parent=5 // pred_region
      %s1014 = ssub.s32 %s11, 2
      // Predicated region
      $region57: #{deconv2d_bn_relu.2} parent=55 // pred_check
        %p1015 = pneg %p87
      $region58: #{deconv2d_bn_relu.2} parent=55 // pred_check_branch
        %1017 = sbr.rel (%p1015) target = $region60
      $region59: #{deconv2d_bn_relu.2} parent=55 // pred_region
        %s1018 = smul.u32 64, %s17
        %p1019 = scmp.lt.s32.totalorder %s1018, 255
        %s1020 = scalar_select %p1019, %s1018, 255
        %s1021 = smul.addr %s1020, 8
        %s1022 = scalar_lea.vmem %s2, %s1021
      $region60: #{deconv2d_bn_relu.2} parent=55 // pred_fallthru
        _
    $region56: #{deconv2d_bn_relu.2} parent=5 // pred_fallthru
      _
  $region6: #{deconv2d_bn_relu.2} parent=0 // loop_footer
    %s15 = sadd.s32 1, %s11
  $region7: #{deconv2d_bn_relu.2} parent=0 // loop_footer_branch
    %10 = sbr.rel target = $region3
  $region8: #{deconv2d_bn_relu.2} parent=0 // loop_exit
    _

</llo_original>
